<compile_context>
chip_gen: v5e
topology: v5e:2x2
jax: 0.10.0
libtpu: 0.0.40
codegen_flags: <defaults>
</compile_context>

<pallas_src>
import functools
import math

import jax
import jax.numpy as jnp
from jax.experimental import pallas as pl
from jax.experimental.pallas import tpu as pltpu


def _round_up(x, m):
    return ((x + m - 1) // m) * m


def _mh_gat_kernel(adj_ref, h_ref, wt_ref, a_ref, sum_ref, z_ref, s_ref, acc_ref,
                   *, num_heads, n_pad, tile_m, neg_slope):
    """One (dst-row-tile, head) grid step of multi-head GAT with fused mean."""
    r = pl.program_id(0)    # destination row tile
    hd = pl.program_id(1)   # attention head (innermost -> adj tile reused)

    # ---- once per kernel: project z for ALL heads, cache per-source scores ----
    @pl.when(jnp.logical_and(r == 0, hd == 0))
    def _():
        acc_ref[...] = jnp.zeros_like(acc_ref)
        hv = h_ref[...]                                            # (n_pad, in_dim) f32
        for k in range(num_heads):                                 # static unroll
            z = jnp.dot(hv, wt_ref[k], preferred_element_type=jnp.float32)
            z_ref[pl.ds(k * n_pad, n_pad), :] = z.astype(z_ref.dtype)   # bf16 cache
            a_src = a_ref[pl.ds(2 * k, 1), :]                      # (1, dp) f32
            # (1, dp) x (n_pad, dp)^T -> (1, n_pad): a_src . z[u] along lanes.
            s_ref[pl.ds(k, 1), :] = jax.lax.dot_general(
                a_src, z, (((1,), (1,)), ((), ())),
                preferred_element_type=jnp.float32)

    # ---- per (row tile, head): masked softmax + aggregation ----
    base = pl.multiple_of(hd * n_pad, tile_m)
    z_all = z_ref[pl.ds(base, n_pad), :]                           # (n_pad, dp) bf16
    row0 = pl.multiple_of(hd * n_pad + r * tile_m, tile_m)
    z_dst = z_ref[pl.ds(row0, tile_m), :]                          # (tile_m, dp) bf16

    a_dst = a_ref[pl.ds(2 * hd + 1, 1), :]                         # (1, dp) f32
    s_src = s_ref[pl.ds(hd, 1), :]                                 # (1, n_pad) f32
    s_dst = jnp.sum(z_dst.astype(jnp.float32) * a_dst,
                    axis=1, keepdims=True)                         # (tile_m, 1) f32

    # Edge logits + LeakyReLU (slope < 1 -> maximum form is exact).
    e = s_dst + s_src                                              # (tile_m, n_pad)
    e = jnp.maximum(e, neg_slope * e)

    # Masked softmax over incoming edges; isolated / padded rows -> zero output.
    mask = adj_ref[...] != 0
    masked_e = jnp.where(mask, e, jnp.float32(-1e30))
    m = jnp.max(masked_e, axis=1, keepdims=True)
    p = jnp.where(mask, jnp.exp(masked_e - m), 0.0)
    denom = jnp.sum(p, axis=1, keepdims=True)                      # (tile_m, 1)
    inv = jnp.where(denom > 0.0,
                    pl.reciprocal(jnp.maximum(denom, jnp.float32(1e-30)),
                                  approx=True),
                    0.0)

    # Aggregate on the MXU in bf16, accumulate f32, normalise after the matmul.
    out = jnp.dot(p.astype(z_all.dtype), z_all,
                  preferred_element_type=jnp.float32) * inv        # (tile_m, dp) f32

    # Fused scalar mean: padded rows/cols of `out` are exactly zero, so the full
    # tile sum equals the sum over the real (node, out_dim) entries.
    partial = jnp.sum(jnp.sum(out, axis=1, keepdims=True), axis=0, keepdims=True)
    acc_ref[...] += partial

    @pl.when(jnp.logical_and(r == pl.num_programs(0) - 1,
                             hd == num_heads - 1))
    def _():
        sum_ref[...] = acc_ref[...]


def multi_head_gat_sum(adj, h, wt_all, a_all, *, neg_slope=0.01, tile_m=128):
    """Returns sum over heads/nodes/out-features of the GAT outputs (scalar)."""
    n, in_dim = h.shape
    num_heads, in_dim_w, dp = wt_all.shape
    assert in_dim_w == in_dim and dp % 128 == 0

    # Zero-pad N to a multiple of tile_m (padded rows have no edges -> zeros).
    n_pad = _round_up(n, tile_m)
    if n_pad != n:
        adj = jnp.pad(adj, ((0, n_pad - n), (0, n_pad - n)))
        h = jnp.pad(h, ((0, n_pad - n), (0, 0)))
    adj_i8 = (adj != 0).astype(jnp.int8)          # 1 byte/edge-slot HBM stream
    h = h.astype(jnp.float32)

    kernel = functools.partial(_mh_gat_kernel, num_heads=num_heads,
                               n_pad=n_pad, tile_m=tile_m, neg_slope=neg_slope)

    total = pl.pallas_call(
        kernel,
        out_shape=jax.ShapeDtypeStruct((1, 1), jnp.float32),
        grid=(n_pad // tile_m, num_heads),
        in_specs=[
            # adj tile depends only on the row tile -> reused across head steps.
            pl.BlockSpec((tile_m, n_pad), lambda r, hd: (r, 0)),
            pl.BlockSpec((n_pad, in_dim), lambda r, hd: (0, 0)),
            pl.BlockSpec((num_heads, in_dim, dp), lambda r, hd: (0, 0, 0)),
            pl.BlockSpec((2 * num_heads, dp), lambda r, hd: (0, 0)),
        ],
        out_specs=pl.BlockSpec((1, 1), lambda r, hd: (0, 0)),
        scratch_shapes=[
            pltpu.VMEM((num_heads * n_pad, dp), jnp.bfloat16),  # z, all heads
            pltpu.VMEM((num_heads, n_pad), jnp.float32),        # a_src . z[u]
            pltpu.VMEM((1, 1), jnp.float32),                    # scalar accumulator
        ],
        compiler_params=pltpu.CompilerParams(
            # Both axes sequential: the first grid step initialises the shared
            # z/s scratch and the adj tile is reused across the head axis.
            dimension_semantics=("arbitrary", "arbitrary"),
            vmem_limit_bytes=48 * 1024 * 1024),
    )(adj_i8, h, wt_all, a_all)
    return total[0, 0]


def multi_head_gat_forward(adj, h, wt_all, a_all, out_dim, *, neg_slope=0.01):
    """MultiHeadGATLayer.forward: torch.mean(torch.stack(head_outs)) -> scalar."""
    n = h.shape[0]                       # REAL node count (before padding)
    num_heads = wt_all.shape[0]
    total = multi_head_gat_sum(adj, h, wt_all, a_all, neg_slope=neg_slope)
    return total / (num_heads * n * out_dim)


# ----------------------------- parameters -----------------------------------

def init_gat_head_params(key, in_dim, out_dim):
    """Matches GATLayer.reset_parameters: xavier_normal_ with gain('relu')."""
    gain = math.sqrt(2.0)
    k_fc, k_attn = jax.random.split(key)
    std_fc = gain * math.sqrt(2.0 / (in_dim + out_dim))
    w_fc = std_fc * jax.random.normal(k_fc, (out_dim, in_dim), dtype=jnp.float32)
    std_attn = gain * math.sqrt(2.0 / (2 * out_dim + 1))
    w_attn = std_attn * jax.random.normal(k_attn, (1, 2 * out_dim),
                                          dtype=jnp.float32)
    return w_fc, w_attn


def pack_gat_params(head_params, in_dim, out_dim):
    """Pre-transpose / zero-pad per-head weights into kernel-ready tensors.

    wt_all: (H, in_dim, Dp)  so that z = h @ wt_all[h]  (padded cols = 0)
    a_all : (2H, Dp)         row 2h = a_src, row 2h+1 = a_dst (padded cols = 0)
    """
    dp = _round_up(out_dim, 128)
    num_heads = len(head_params)
    wt_all = jnp.zeros((num_heads, in_dim, dp), jnp.float32)
    a_all = jnp.zeros((2 * num_heads, dp), jnp.float32)
    for k, (w_fc, w_attn) in enumerate(head_params):
        wt_all = wt_all.at[k, :, :out_dim].set(jnp.transpose(w_fc))
        a_all = a_all.at[2 * k, :out_dim].set(w_attn[0, :out_dim])       # a_src
        a_all = a_all.at[2 * k + 1, :out_dim].set(w_attn[0, out_dim:])   # a_dst
    return wt_all, a_all


# ------------------------------ reference ------------------------------------

def reference_forward(adj, h, head_params, out_dim, neg_slope=0.01):
    """Pure-JAX reference of MultiHeadGATLayer.forward (scalar mean)."""
    outs = []
    for w_fc, w_attn in head_params:
        z = h @ w_fc.T                                       # (N, out_dim)
        a_src = w_attn[0, :out_dim]
        a_dst = w_attn[0, out_dim:]
        e = (z @ a_dst)[:, None] + (z @ a_src)[None, :]      # e[v, u]
        e = jnp.where(e >= 0.0, e, neg_slope * e)
        mask = adj > 0
        masked_e = jnp.where(mask, e, -jnp.inf)
        m = jnp.max(masked_e, axis=1, keepdims=True)
        p = jnp.where(mask, jnp.exp(e - m), 0.0)
        denom = jnp.sum(p, axis=1, keepdims=True)
        alpha = p / jnp.maximum(denom, 1e-30)
        outs.append(alpha @ z)
    return jnp.mean(jnp.stack(outs))


# --------------------------------- demo --------------------------------------

if __name__ == "__main__":
    N = 200          # graph nodes (non-multiple of 128 -> exercises padding)
    IN_DIM = 32
    OUT_DIM = 64
    NUM_HEADS = 4

    root = jax.random.PRNGKey(0)
    k_adj, k_feat, k_params = jax.random.split(root, 3)

    # Deterministic synthetic graph: ~10% random directed edges + self-loops.
    rand_edges = (jax.random.uniform(k_adj, (N, N)) < 0.10).astype(jnp.float32)
    adj = jnp.maximum(rand_edges, jnp.eye(N, dtype=jnp.float32))

    h = jax.random.normal(k_feat, (N, IN_DIM), dtype=jnp.float32)

    head_keys = jax.random.split(k_params, NUM_HEADS)
    head_params = [init_gat_head_params(k, IN_DIM, OUT_DIM) for k in head_keys]
    wt_all, a_all = pack_gat_params(head_params, IN_DIM, OUT_DIM)

    out = multi_head_gat_forward(adj, h, wt_all, a_all, OUT_DIM)
    out = jax.block_until_ready(out)
    assert out.shape == (), out.shape
    assert bool(jnp.isfinite(out)), out

    ref = reference_forward(adj, h, head_params, OUT_DIM)
    err = abs(float(out) - float(ref))
    assert err <= 5e-3 + 2e-2 * abs(float(ref)), (float(out), float(ref), err)

    print("KERNEL_OK")
</pallas_src>

<mosaic_0001>
module attributes {stable_mosaic.version = 11 : i64} {
  func.func @_mh_gat_kernel(%arg0: i32, %arg1: i32, %arg2: memref<128x256xi8, #tpu.memory_space<vmem>>, %arg3: memref<256x32xf32, #tpu.memory_space<vmem>>, %arg4: memref<4x32x128xf32, #tpu.memory_space<vmem>>, %arg5: memref<8x128xf32, #tpu.memory_space<vmem>>, %arg6: memref<1x1xf32, #tpu.memory_space<vmem>>, %arg7: memref<1024x128xbf16, #tpu.memory_space<vmem>>, %arg8: memref<4x256xf32, #tpu.memory_space<vmem>>, %arg9: memref<1x1xf32, #tpu.memory_space<vmem>>) attributes {dimension_semantics = [#tpu.dimension_semantics<arbitrary>, #tpu.dimension_semantics<arbitrary>], iteration_bounds = array<i64: 2, 4>, scalar_prefetch = 0 : i64, scratch_operands = 3 : i64, tpu.core_type = #tpu.core_type<tc>, window_params = [{transform_indices = @transform_0, window_bounds = array<i64: 128, 256>}, {pipeline_mode = #tpu.pipeline_mode<synchronous>, transform_indices = @transform_1, window_bounds = array<i64: 256, 32>}, {pipeline_mode = #tpu.pipeline_mode<synchronous>, transform_indices = @transform_2, window_bounds = array<i64: 4, 32, 128>}, {pipeline_mode = #tpu.pipeline_mode<synchronous>, transform_indices = @transform_3, window_bounds = array<i64: 8, 128>}, {pipeline_mode = #tpu.pipeline_mode<synchronous>, transform_indices = @transform_4, window_bounds = array<i64: 1, 1>}]} {
    %c0_i32 = arith.constant 0 : i32
    %0 = arith.cmpi eq, %arg0, %c0_i32 : i32
    %c0_i32_0 = arith.constant 0 : i32
    %1 = arith.cmpi eq, %arg1, %c0_i32_0 : i32
    %2 = arith.andi %0, %1 : i1
    %3 = arith.extui %2 : i1 to i32
    %c0_i32_1 = arith.constant 0 : i32
    %4 = arith.cmpi ne, %3, %c0_i32_1 : i32
    scf.if %4 {
      %cst_25 = arith.constant 0.000000e+00 : f32
      %69 = vector.broadcast %cst_25 : f32 to vector<1x1xf32>
      %c0_26 = arith.constant 0 : index
      %c0_27 = arith.constant 0 : index
      %70 = vector.load %arg9[%c0_26, %c0_27] : memref<1x1xf32, #tpu.memory_space<vmem>>, vector<1x1xf32>
      tpu.vector_store %arg9[%c0_26, %c0_27], %69 {strides = array<i32>} : memref<1x1xf32, #tpu.memory_space<vmem>>, vector<1x1xf32>,
      %c0_28 = arith.constant 0 : index
      %c0_29 = arith.constant 0 : index
      %71 = vector.load %arg3[%c0_28, %c0_29] : memref<256x32xf32, #tpu.memory_space<vmem>>, vector<256x32xf32>
      %c0_30 = arith.constant 0 : index
      %c0_31 = arith.constant 0 : index
      %c0_32 = arith.constant 0 : index
      %72 = vector.load %arg4[%c0_30, %c0_31, %c0_32] : memref<4x32x128xf32, #tpu.memory_space<vmem>>, vector<1x32x128xf32>
      %73 = vector.shape_cast %72 : vector<1x32x128xf32> to vector<32x128xf32>
      %cst_33 = arith.constant dense<0.000000e+00> : vector<256x128xf32>
      %74 = tpu.matmul %71, %73, %cst_33 {dimension_numbers = #tpu.dot_dimension_numbers<[1], [0], [0], [1], [0, 0, 1, 1], [], []>} : vector<256x32xf32>, vector<32x128xf32>, vector<256x128xf32> -> vector<256x128xf32>
      %75 = arith.truncf %74 : vector<256x128xf32> to vector<256x128xbf16>
      %c0_34 = arith.constant 0 : index
      %c0_35 = arith.constant 0 : index
      %76 = vector.load %arg7[%c0_34, %c0_35] : memref<1024x128xbf16, #tpu.memory_space<vmem>>, vector<256x128xbf16>
      tpu.vector_store %arg7[%c0_34, %c0_35], %75 {strides = array<i32>} : memref<1024x128xbf16, #tpu.memory_space<vmem>>, vector<256x128xbf16>,
      %c0_36 = arith.constant 0 : index
      %c0_37 = arith.constant 0 : index
      %77 = vector.load %arg5[%c0_36, %c0_37] : memref<8x128xf32, #tpu.memory_space<vmem>>, vector<1x128xf32>
      %cst_38 = arith.constant dense<0.000000e+00> : vector<1x256xf32>
      %78 = tpu.matmul %77, %74, %cst_38 {dimension_numbers = #tpu.dot_dimension_numbers<[1], [1], [0], [0], [0, 0, 1, 0], [], []>} : vector<1x128xf32>, vector<256x128xf32>, vector<1x256xf32> -> vector<1x256xf32>
      %c0_39 = arith.constant 0 : index
      %c0_40 = arith.constant 0 : index
      %79 = vector.load %arg8[%c0_39, %c0_40] : memref<4x256xf32, #tpu.memory_space<vmem>>, vector<1x256xf32>
      tpu.vector_store %arg8[%c0_39, %c0_40], %78 {strides = array<i32>} : memref<4x256xf32, #tpu.memory_space<vmem>>, vector<1x256xf32>,
      %c1 = arith.constant 1 : index
      %c0_41 = arith.constant 0 : index
      %c0_42 = arith.constant 0 : index
      %80 = vector.load %arg4[%c1, %c0_41, %c0_42] : memref<4x32x128xf32, #tpu.memory_space<vmem>>, vector<1x32x128xf32>
      %81 = vector.shape_cast %80 : vector<1x32x128xf32> to vector<32x128xf32>
      %cst_43 = arith.constant dense<0.000000e+00> : vector<256x128xf32>
      %82 = tpu.matmul %71, %81, %cst_43 {dimension_numbers = #tpu.dot_dimension_numbers<[1], [0], [0], [1], [0, 0, 1, 1], [], []>} : vector<256x32xf32>, vector<32x128xf32>, vector<256x128xf32> -> vector<256x128xf32>
      %83 = arith.truncf %82 : vector<256x128xf32> to vector<256x128xbf16>
      %c256 = arith.constant 256 : index
      %c0_44 = arith.constant 0 : index
      %84 = vector.load %arg7[%c256, %c0_44] : memref<1024x128xbf16, #tpu.memory_space<vmem>>, vector<256x128xbf16>
      tpu.vector_store %arg7[%c256, %c0_44], %83 {strides = array<i32>} : memref<1024x128xbf16, #tpu.memory_space<vmem>>, vector<256x128xbf16>,
      %c2 = arith.constant 2 : index
      %c0_45 = arith.constant 0 : index
      %85 = vector.load %arg5[%c2, %c0_45] : memref<8x128xf32, #tpu.memory_space<vmem>>, vector<1x128xf32>
      %cst_46 = arith.constant dense<0.000000e+00> : vector<1x256xf32>
      %86 = tpu.matmul %85, %82, %cst_46 {dimension_numbers = #tpu.dot_dimension_numbers<[1], [1], [0], [0], [0, 0, 1, 0], [], []>} : vector<1x128xf32>, vector<256x128xf32>, vector<1x256xf32> -> vector<1x256xf32>
      %c1_47 = arith.constant 1 : index
      %c0_48 = arith.constant 0 : index
      %87 = vector.load %arg8[%c1_47, %c0_48] : memref<4x256xf32, #tpu.memory_space<vmem>>, vector<1x256xf32>
      tpu.vector_store %arg8[%c1_47, %c0_48], %86 {strides = array<i32>} : memref<4x256xf32, #tpu.memory_space<vmem>>, vector<1x256xf32>,
      %c2_49 = arith.constant 2 : index
      %c0_50 = arith.constant 0 : index
      %c0_51 = arith.constant 0 : index
      %88 = vector.load %arg4[%c2_49, %c0_50, %c0_51] : memref<4x32x128xf32, #tpu.memory_space<vmem>>, vector<1x32x128xf32>
      %89 = vector.shape_cast %88 : vector<1x32x128xf32> to vector<32x128xf32>
      %cst_52 = arith.constant dense<0.000000e+00> : vector<256x128xf32>
      %90 = tpu.matmul %71, %89, %cst_52 {dimension_numbers = #tpu.dot_dimension_numbers<[1], [0], [0], [1], [0, 0, 1, 1], [], []>} : vector<256x32xf32>, vector<32x128xf32>, vector<256x128xf32> -> vector<256x128xf32>
      %91 = arith.truncf %90 : vector<256x128xf32> to vector<256x128xbf16>
      %c512 = arith.constant 512 : index
      %c0_53 = arith.constant 0 : index
      %92 = vector.load %arg7[%c512, %c0_53] : memref<1024x128xbf16, #tpu.memory_space<vmem>>, vector<256x128xbf16>
      tpu.vector_store %arg7[%c512, %c0_53], %91 {strides = array<i32>} : memref<1024x128xbf16, #tpu.memory_space<vmem>>, vector<256x128xbf16>,
      %c4 = arith.constant 4 : index
      %c0_54 = arith.constant 0 : index
      %93 = vector.load %arg5[%c4, %c0_54] : memref<8x128xf32, #tpu.memory_space<vmem>>, vector<1x128xf32>
      %cst_55 = arith.constant dense<0.000000e+00> : vector<1x256xf32>
      %94 = tpu.matmul %93, %90, %cst_55 {dimension_numbers = #tpu.dot_dimension_numbers<[1], [1], [0], [0], [0, 0, 1, 0], [], []>} : vector<1x128xf32>, vector<256x128xf32>, vector<1x256xf32> -> vector<1x256xf32>
      %c2_56 = arith.constant 2 : index
      %c0_57 = arith.constant 0 : index
      %95 = vector.load %arg8[%c2_56, %c0_57] : memref<4x256xf32, #tpu.memory_space<vmem>>, vector<1x256xf32>
      tpu.vector_store %arg8[%c2_56, %c0_57], %94 {strides = array<i32>} : memref<4x256xf32, #tpu.memory_space<vmem>>, vector<1x256xf32>,
      %c3 = arith.constant 3 : index
      %c0_58 = arith.constant 0 : index
      %c0_59 = arith.constant 0 : index
      %96 = vector.load %arg4[%c3, %c0_58, %c0_59] : memref<4x32x128xf32, #tpu.memory_space<vmem>>, vector<1x32x128xf32>
      %97 = vector.shape_cast %96 : vector<1x32x128xf32> to vector<32x128xf32>
      %cst_60 = arith.constant dense<0.000000e+00> : vector<256x128xf32>
      %98 = tpu.matmul %71, %97, %cst_60 {dimension_numbers = #tpu.dot_dimension_numbers<[1], [0], [0], [1], [0, 0, 1, 1], [], []>} : vector<256x32xf32>, vector<32x128xf32>, vector<256x128xf32> -> vector<256x128xf32>
      %99 = arith.truncf %98 : vector<256x128xf32> to vector<256x128xbf16>
      %c768 = arith.constant 768 : index
      %c0_61 = arith.constant 0 : index
      %100 = vector.load %arg7[%c768, %c0_61] : memref<1024x128xbf16, #tpu.memory_space<vmem>>, vector<256x128xbf16>
      tpu.vector_store %arg7[%c768, %c0_61], %99 {strides = array<i32>} : memref<1024x128xbf16, #tpu.memory_space<vmem>>, vector<256x128xbf16>,
      %c6 = arith.constant 6 : index
      %c0_62 = arith.constant 0 : index
      %101 = vector.load %arg5[%c6, %c0_62] : memref<8x128xf32, #tpu.memory_space<vmem>>, vector<1x128xf32>
      %cst_63 = arith.constant dense<0.000000e+00> : vector<1x256xf32>
      %102 = tpu.matmul %101, %98, %cst_63 {dimension_numbers = #tpu.dot_dimension_numbers<[1], [1], [0], [0], [0, 0, 1, 0], [], []>} : vector<1x128xf32>, vector<256x128xf32>, vector<1x256xf32> -> vector<1x256xf32>
      %c3_64 = arith.constant 3 : index
      %c0_65 = arith.constant 0 : index
      %103 = vector.load %arg8[%c3_64, %c0_65] : memref<4x256xf32, #tpu.memory_space<vmem>>, vector<1x256xf32>
      tpu.vector_store %arg8[%c3_64, %c0_65], %102 {strides = array<i32>} : memref<4x256xf32, #tpu.memory_space<vmem>>, vector<1x256xf32>,
    } else {
    }
    %c256_i32 = arith.constant 256 : i32
    %5 = arith.muli %arg1, %c256_i32 : i32
    %6 = tpu.assume_multiple %5, 128 : i32
    %7 = arith.index_cast %6 : i32 to index
    %c0 = arith.constant 0 : index
    %8 = vector.load %arg7[%7, %c0] : memref<1024x128xbf16, #tpu.memory_space<vmem>>, vector<256x128xbf16>
    %c256_i32_2 = arith.constant 256 : i32
    %9 = arith.muli %arg1, %c256_i32_2 : i32
    %c128_i32 = arith.constant 128 : i32
    %10 = arith.muli %arg0, %c128_i32 : i32
    %11 = arith.addi %9, %10 : i32
    %12 = tpu.assume_multiple %11, 128 : i32
    %13 = arith.index_cast %12 : i32 to index
    %c0_3 = arith.constant 0 : index
    %14 = vector.load %arg7[%13, %c0_3] : memref<1024x128xbf16, #tpu.memory_space<vmem>>, vector<128x128xbf16>
    %c2_i32 = arith.constant 2 : i32
    %15 = arith.muli %c2_i32, %arg1 : i32
    %c1_i32 = arith.constant 1 : i32
    %16 = arith.addi %15, %c1_i32 : i32
    %17 = arith.index_cast %16 : i32 to index
    %c0_4 = arith.constant 0 : index
    %18 = vector.load %arg5[%17, %c0_4] : memref<8x128xf32, #tpu.memory_space<vmem>>, vector<1x128xf32>
    %19 = arith.index_cast %arg1 : i32 to index
    %c0_5 = arith.constant 0 : index
    %20 = vector.load %arg8[%19, %c0_5] : memref<4x256xf32, #tpu.memory_space<vmem>>, vector<1x256xf32>
    %21 = arith.extf %14 : vector<128x128xbf16> to vector<128x128xf32>
    %22 = vector.broadcast %18 : vector<1x128xf32> to vector<128x128xf32>
    %23 = arith.mulf %21, %22 : vector<128x128xf32>
    %cst = arith.constant dense<0.000000e+00> : vector<128xf32>
    %24 = vector.multi_reduction <add>, %23, %cst [1] : vector<128x128xf32> to vector<128xf32>
    %25 = vector.shape_cast %24 : vector<128xf32> to vector<128x1xf32>
    %26 = vector.broadcast %25 : vector<128x1xf32> to vector<128x256xf32>
    %27 = vector.broadcast %20 : vector<1x256xf32> to vector<128x256xf32>
    %28 = arith.addf %26, %27 : vector<128x256xf32>
    %cst_6 = arith.constant 0.00999999977 : f32
    %29 = vector.broadcast %cst_6 : f32 to vector<128x256xf32>
    %30 = arith.mulf %29, %28 : vector<128x256xf32>
    %31 = arith.maximumf %28, %30 : vector<128x256xf32>
    %c0_7 = arith.constant 0 : index
    %c0_8 = arith.constant 0 : index
    %32 = vector.load %arg2[%c0_7, %c0_8] : memref<128x256xi8, #tpu.memory_space<vmem>>, vector<128x256xi8>
    %c0_i8 = arith.constant 0 : i8
    %33 = vector.broadcast %c0_i8 : i8 to vector<128x256xi8>
    %34 = arith.cmpi ne, %32, %33 : vector<128x256xi8>
    %cst_9 = arith.constant -1.000000e+30 : f32
    %35 = vector.broadcast %cst_9 : f32 to vector<128x256xf32>
    %36 = arith.select %34, %31, %35 : vector<128x256xi1>, vector<128x256xf32>
    %cst_10 = arith.constant dense<0xFF800000> : vector<128xf32>
    %37 = vector.multi_reduction <maximumf>, %36, %cst_10 [1] : vector<128x256xf32> to vector<128xf32>
    %38 = vector.shape_cast %37 : vector<128xf32> to vector<128x1xf32>
    %39 = vector.broadcast %38 : vector<128x1xf32> to vector<128x256xf32>
    %40 = arith.subf %36, %39 : vector<128x256xf32>
    %41 = math.exp %40 : vector<128x256xf32>
    %cst_11 = arith.constant 0.000000e+00 : f32
    %42 = vector.broadcast %cst_11 : f32 to vector<128x256xf32>
    %43 = arith.select %34, %41, %42 : vector<128x256xi1>, vector<128x256xf32>
    %cst_12 = arith.constant dense<0.000000e+00> : vector<128xf32>
    %44 = vector.multi_reduction <add>, %43, %cst_12 [1] : vector<128x256xf32> to vector<128xf32>
    %45 = vector.shape_cast %44 : vector<128xf32> to vector<128x1xf32>
    %cst_13 = arith.constant 0.000000e+00 : f32
    %46 = vector.broadcast %cst_13 : f32 to vector<128x1xf32>
    %47 = arith.cmpf ogt, %45, %46 : vector<128x1xf32>
    %cst_14 = arith.constant 1.000000e-30 : f32
    %48 = vector.broadcast %cst_14 : f32 to vector<128x1xf32>
    %49 = arith.maximumf %45, %48 : vector<128x1xf32>
    %50 = tpu.reciprocal %49 {approx = true} : vector<128x1xf32> -> vector<128x1xf32>
    %cst_15 = arith.constant 0.000000e+00 : f32
    %51 = vector.broadcast %cst_15 : f32 to vector<128x1xf32>
    %52 = arith.select %47, %50, %51 : vector<128x1xi1>, vector<128x1xf32>
    %53 = arith.truncf %43 : vector<128x256xf32> to vector<128x256xbf16>
    %cst_16 = arith.constant dense<0.000000e+00> : vector<128x128xf32>
    %54 = tpu.matmul %53, %8, %cst_16 {dimension_numbers = #tpu.dot_dimension_numbers<[1], [0], [0], [1], [0, 0, 1, 1], [], []>} : vector<128x256xbf16>, vector<256x128xbf16>, vector<128x128xf32> -> vector<128x128xf32>
    %55 = vector.broadcast %52 : vector<128x1xf32> to vector<128x128xf32>
    %56 = arith.mulf %54, %55 : vector<128x128xf32>
    %cst_17 = arith.constant dense<0.000000e+00> : vector<128xf32>
    %57 = vector.multi_reduction <add>, %56, %cst_17 [1] : vector<128x128xf32> to vector<128xf32>
    %58 = vector.shape_cast %57 : vector<128xf32> to vector<128x1xf32>
    %cst_18 = arith.constant dense<0.000000e+00> : vector<1xf32>
    %59 = vector.multi_reduction <add>, %58, %cst_18 [0] : vector<128x1xf32> to vector<1xf32>
    %60 = vector.shape_cast %59 : vector<1xf32> to vector<1x1xf32>
    %c0_19 = arith.constant 0 : index
    %c0_20 = arith.constant 0 : index
    %61 = vector.load %arg9[%c0_19, %c0_20] : memref<1x1xf32, #tpu.memory_space<vmem>>, vector<1x1xf32>
    %62 = arith.addf %61, %60 : vector<1x1xf32>
    %c0_21 = arith.constant 0 : index
    %c0_22 = arith.constant 0 : index
    %63 = vector.load %arg9[%c0_21, %c0_22] : memref<1x1xf32, #tpu.memory_space<vmem>>, vector<1x1xf32>
    tpu.vector_store %arg9[%c0_21, %c0_22], %62 {strides = array<i32>} : memref<1x1xf32, #tpu.memory_space<vmem>>, vector<1x1xf32>,
    %c1_i32_23 = arith.constant 1 : i32
    %64 = arith.cmpi eq, %arg0, %c1_i32_23 : i32
    %c3_i32 = arith.constant 3 : i32
    %65 = arith.cmpi eq, %arg1, %c3_i32 : i32
    %66 = arith.andi %64, %65 : i1
    %67 = arith.extui %66 : i1 to i32
    %c0_i32_24 = arith.constant 0 : i32
    %68 = arith.cmpi ne, %67, %c0_i32_24 : i32
    scf.if %68 {
      %c0_25 = arith.constant 0 : index
      %c0_26 = arith.constant 0 : index
      %69 = vector.load %arg9[%c0_25, %c0_26] : memref<1x1xf32, #tpu.memory_space<vmem>>, vector<1x1xf32>
      %c0_27 = arith.constant 0 : index
      %c0_28 = arith.constant 0 : index
      %70 = vector.load %arg6[%c0_27, %c0_28] : memref<1x1xf32, #tpu.memory_space<vmem>>, vector<1x1xf32>
      tpu.vector_store %arg6[%c0_27, %c0_28], %69 {strides = array<i32>} : memref<1x1xf32, #tpu.memory_space<vmem>>, vector<1x1xf32>,
    } else {
    }
    return
  }
  func.func @transform_0(%arg0: i32, %arg1: i32) -> (i32, i32) {
    %c0_i32 = arith.constant 0 : i32
    %c0_i32_0 = arith.constant 0 : i32
    return %arg0, %c0_i32 : i32, i32
  }
  func.func @transform_1(%arg0: i32, %arg1: i32) -> (i32, i32) {
    %c0_i32 = arith.constant 0 : i32
    %c0_i32_0 = arith.constant 0 : i32
    %c0_i32_1 = arith.constant 0 : i32
    return %c0_i32, %c0_i32_0 : i32, i32
  }
  func.func @transform_2(%arg0: i32, %arg1: i32) -> (i32, i32, i32) {
    %c0_i32 = arith.constant 0 : i32
    %c0_i32_0 = arith.constant 0 : i32
    %c0_i32_1 = arith.constant 0 : i32
    %c0_i32_2 = arith.constant 0 : i32
    return %c0_i32, %c0_i32_0, %c0_i32_1 : i32, i32, i32
  }
  func.func @transform_3(%arg0: i32, %arg1: i32) -> (i32, i32) {
    %c0_i32 = arith.constant 0 : i32
    %c0_i32_0 = arith.constant 0 : i32
    %c0_i32_1 = arith.constant 0 : i32
    return %c0_i32, %c0_i32_0 : i32, i32
  }
  func.func @transform_4(%arg0: i32, %arg1: i32) -> (i32, i32) {
    %c0_i32 = arith.constant 0 : i32
    %c0_i32_0 = arith.constant 0 : i32
    %c0_i32_1 = arith.constant 0 : i32
    return %c0_i32, %c0_i32_0 : i32, i32
  }
}

</mosaic_0001>

<llo_original>
// kernel: tpu_custom_call.1
$region0: #{tpu_custom_call.1}
  #allocation0 [shape = 'u32[]', space=smem, size = 0x4, offset = 0x4, fixed_abs, tag = 'smem constant byte address 0x4 - core index']
  #allocation1 [shape = 'u32[72,128]{1,0:T(1,128)}', space=vmem, size = 0x9000, scoped, tag = 'internal scratch']
  #allocation2 [shape = 'bf16[1024,128]{1,0:T(8,128)(2,1)}', space=vmem, size = 0x40000, scoped, tag = 'scratch operand']
  #allocation3 [shape = 'f32[4,256]{1,0:T(4,128)}', space=vmem, size = 0x1000, scoped, tag = 'scratch operand']
  #allocation4 [shape = 'f32[1,1]{1,0:T(1,128)}', space=vmem, size = 0x200, scoped, tag = 'scratch operand']
  %s0 = inlined_call_operand.vmem [shape: s8[256,256], index: 0, kind: input, shape index: {}]
  %s1 = inlined_call_operand.vmem [shape: f32[256,32], index: 1, kind: input, shape index: {}]
  %s2 = inlined_call_operand.vmem [shape: f32[4,32,128], index: 2, kind: input, shape index: {}]
  %s3 = inlined_call_operand.vmem [shape: f32[8,128], index: 3, kind: input, shape index: {}]
  %s4 = inlined_call_operand.hbm [shape: f32[1,1], index: 4, kind: output, shape index: {}]
  %s5 = sld [smem:[#allocation0]]
  $region57: #{tpu_custom_call.1} parent=0
    _
  %s7 = ssub.s32 1, %s5
  %s8 = scalar_select 0, %s7, %s5
  $region1: #{tpu_custom_call.1} parent=0
    #allocation5 [shape = 'u8[512]{0}', space=vmem, size = 0x400, scoped, tag = 'output window, operand 0, single buffered']
    #allocation6 [shape = 's32[2]{0}', space=sflag, size = 0x8, scoped, tag = 'scoped memory for tpu_custom_call.1']
    %9 = vsyncpa [#allocation6], 0
    loop: start=0, step=1, limit=10
    $region2: #{tpu_custom_call.1} parent=1 // loop_pre_header
      _
    $region3: #{tpu_custom_call.1} parent=1 // loop_header
      %s11 = sphi 0, %s15
      %p12 = scmp.ge.s32.totalorder %s11, 10
      %s18 = sphi 0, %s30
      %s19 = sphi 0, %s26
      %s20 = sphi 0, %s18
      %s21 = sphi 0, %s19
      %s22 = sphi 0, %s20
      %s23 = sphi 0, %s21
      %s33 = sphi 0, %s35
      %s36 = sphi 0, %s33
      %s37 = sphi 0, %s36
      %s53 = sphi 0, %s37
      %s57 = sphi 0, %s57
      %s59 = sphi 0, %s57
      %s60 = sphi 0, %s59
      %s74 = sphi 0, %s60
      %s78 = sphi 0, %s78
      %s80 = sphi 0, %s78
      %s81 = sphi 0, %s80
      %s95 = sphi 0, %s81
      %s99 = sphi 0, %s99
      %s101 = sphi 0, %s99
      %s102 = sphi 0, %s101
      %s116 = sphi 0, %s102
      %s120 = sphi 0, %s120
      %s122 = sphi 0, %s120
      %s123 = sphi 0, %s122
      %s137 = sphi 0, %s123
    $region4: #{tpu_custom_call.1} parent=1 // loop_header_branch
      %14 = sbr.rel (%p12) target = $region8
    $region5: #{tpu_custom_call.1} parent=1 // loop_body
      %s16 = ssub.s32 %s11, 1
      %s17 = ssub.s32 %s11, 2
      %s24 = sadd.s32 1, %s19
      %p25 = scmp.ge.s32.totalorder %s24, 4
      %s26 = scalar_select %p25, 0, %s24
      %s27 = sadd.s32 1, %s18
      %s28 = scalar_select %p25, %s27, %s18
      %p29 = scmp.ge.s32.totalorder %s28, 2
      %s30 = scalar_select %p29, 0, %s28
      %s31 = ssub.s32 %s18, %s30
      %p32 = scmp.eq.s32.totalorder %s31, 0
      %s34 = sadd.s32 %s33, 1
      %s35 = scalar_select %p32, %s33, %s34
      %p38 = pneg %p32
      %p39 = scmp.eq.s32.totalorder %s11, 7
      %p40 = por %p38, %p39
      %p41 = scmp.ne.s32.totalorder %s33, %s36
      %p42 = scmp.eq.s32.totalorder %s11, 0
      %p43 = por %p41, %p42
      %p44 = scmp.ne.s32.totalorder %s33, %s36
      %p45 = scmp.eq.s32.totalorder %s16, 7
      %p46 = por %p44, %p45
      %p47 = scmp.ne.s32.totalorder %s36, %s37
      %p48 = scmp.eq.s32.totalorder %s16, 0
      %p49 = por %p47, %p48
      %p50 = scmp.ne.s32.totalorder %s36, %s37
      %p51 = scmp.eq.s32.totalorder %s17, 7
      %p52 = por %p50, %p51
      %p54 = scmp.ne.s32.totalorder %s37, %s53
      %p55 = scmp.eq.s32.totalorder %s17, 0
      %p56 = por %p54, %p55
      %s58 = sadd.s32 %s57, 1
      %p61 = scmp.eq.s32.totalorder %s11, 7
      %p62 = scmp.ne.s32.totalorder %s57, %s59
      %p63 = scmp.eq.s32.totalorder %s11, 0
      %p64 = por %p62, %p63
      %p65 = scmp.ne.s32.totalorder %s57, %s59
      %p66 = scmp.eq.s32.totalorder %s16, 7
      %p67 = por %p65, %p66
      %p68 = scmp.ne.s32.totalorder %s59, %s60
      %p69 = scmp.eq.s32.totalorder %s16, 0
      %p70 = por %p68, %p69
      %p71 = scmp.ne.s32.totalorder %s59, %s60
      %p72 = scmp.eq.s32.totalorder %s17, 7
      %p73 = por %p71, %p72
      %p75 = scmp.ne.s32.totalorder %s60, %s74
      %p76 = scmp.eq.s32.totalorder %s17, 0
      %p77 = por %p75, %p76
      %s79 = sadd.s32 %s78, 1
      %p82 = scmp.eq.s32.totalorder %s11, 7
      %p83 = scmp.ne.s32.totalorder %s78, %s80
      %p84 = scmp.eq.s32.totalorder %s11, 0
      %p85 = por %p83, %p84
      %p86 = scmp.ne.s32.totalorder %s78, %s80
      %p87 = scmp.eq.s32.totalorder %s16, 7
      %p88 = por %p86, %p87
      %p89 = scmp.ne.s32.totalorder %s80, %s81
      %p90 = scmp.eq.s32.totalorder %s16, 0
      %p91 = por %p89, %p90
      %p92 = scmp.ne.s32.totalorder %s80, %s81
      %p93 = scmp.eq.s32.totalorder %s17, 7
      %p94 = por %p92, %p93
      %p96 = scmp.ne.s32.totalorder %s81, %s95
      %p97 = scmp.eq.s32.totalorder %s17, 0
      %p98 = por %p96, %p97
      %s100 = sadd.s32 %s99, 1
      %p103 = scmp.eq.s32.totalorder %s11, 7
      %p104 = scmp.ne.s32.totalorder %s99, %s101
      %p105 = scmp.eq.s32.totalorder %s11, 0
      %p106 = por %p104, %p105
      %p107 = scmp.ne.s32.totalorder %s99, %s101
      %p108 = scmp.eq.s32.totalorder %s16, 7
      %p109 = por %p107, %p108
      %p110 = scmp.ne.s32.totalorder %s101, %s102
      %p111 = scmp.eq.s32.totalorder %s16, 0
      %p112 = por %p110, %p111
      %p113 = scmp.ne.s32.totalorder %s101, %s102
      %p114 = scmp.eq.s32.totalorder %s17, 7
      %p115 = por %p113, %p114
      %p117 = scmp.ne.s32.totalorder %s102, %s116
      %p118 = scmp.eq.s32.totalorder %s17, 0
      %p119 = por %p117, %p118
      %s121 = sadd.s32 %s120, 1
      %p124 = scmp.eq.s32.totalorder %s11, 7
      %p125 = scmp.ne.s32.totalorder %s120, %s122
      %p126 = scmp.eq.s32.totalorder %s11, 0
      %p127 = por %p125, %p126
      %p128 = scmp.ne.s32.totalorder %s120, %s122
      %p129 = scmp.eq.s32.totalorder %s16, 7
      %p130 = por %p128, %p129
      %p131 = scmp.ne.s32.totalorder %s122, %s123
      %p132 = scmp.eq.s32.totalorder %s16, 0
      %p133 = por %p131, %p132
      %p134 = scmp.ne.s32.totalorder %s122, %s123
      %p135 = scmp.eq.s32.totalorder %s17, 7
      %p136 = por %p134, %p135
      %p138 = scmp.ne.s32.totalorder %s123, %s137
      %p139 = scmp.eq.s32.totalorder %s17, 0
      %p140 = por %p138, %p139
      %p141 = scmp.le.s32.totalorder 1, %s11
      %p142 = scmp.lt.s32.totalorder %s11, 9
      %p143 = pnand %p141, %p142
      %p144 = pneg %p143
      // Predicated region
      $region9: #{tpu_custom_call.1} parent=5 // pred_check
        _
      $region10: #{tpu_custom_call.1} parent=5 // pred_check_branch
        %146 = sbr.rel (%p143) target = $region12
      $region11: #{tpu_custom_call.1} parent=5 // pred_region
        %s147 = ssub.s32 %s11, 1
        // Predicated region
        $region13: #{tpu_custom_call.1} parent=11 // pred_check
          %p148 = pneg %p70
        $region14: #{tpu_custom_call.1} parent=11 // pred_check_branch
          %150 = sbr.rel (%p148) target = $region16
        $region15: #{tpu_custom_call.1} parent=11 // pred_region
          _
        $region16: #{tpu_custom_call.1} parent=11 // pred_fallthru
          _
        // Predicated region
        $region17: #{tpu_custom_call.1} parent=11 // pred_check
          %p151 = pneg %p91
        $region18: #{tpu_custom_call.1} parent=11 // pred_check_branch
          %153 = sbr.rel (%p151) target = $region20
        $region19: #{tpu_custom_call.1} parent=11 // pred_region
          _
        $region20: #{tpu_custom_call.1} parent=11 // pred_fallthru
          _
        // Predicated region
        $region21: #{tpu_custom_call.1} parent=11 // pred_check
          %p154 = pneg %p112
        $region22: #{tpu_custom_call.1} parent=11 // pred_check_branch
          %156 = sbr.rel (%p154) target = $region24
        $region23: #{tpu_custom_call.1} parent=11 // pred_region
          _
        $region24: #{tpu_custom_call.1} parent=11 // pred_fallthru
          _
      $region12: #{tpu_custom_call.1} parent=5 // pred_fallthru
        _
      %p157 = scmp.lt.s32.totalorder %s11, 8
      // Predicated region
      $region25: #{tpu_custom_call.1} parent=5 // pred_check
        %p158 = pneg %p157
      $region26: #{tpu_custom_call.1} parent=5 // pred_check_branch
        %160 = sbr.rel (%p158) target = $region28
      $region27: #{tpu_custom_call.1} parent=5 // pred_region
        // Predicated region
        $region29: #{tpu_custom_call.1} parent=27 // pred_check
          %p161 = pneg %p43
        $region30: #{tpu_custom_call.1} parent=27 // pred_check_branch
          %163 = sbr.rel (%p161) target = $region32
        $region31: #{tpu_custom_call.1} parent=27 // pred_region
          %s164 = smul.u32 4, %s18
          %p165 = scmp.lt.s32.totalorder %s164, 7
          %s166 = scalar_select %p165, %s164, 7
          %s167 = smul.addr %s166, 2
          %s168 = smul.addr %s167, 8
          %s169 = scalar_lea.vmem %s0, %s168
          %s170 = smul.u32 4, %s18
        $region32: #{tpu_custom_call.1} parent=27 // pred_fallthru
          _
      $region28: #{tpu_custom_call.1} parent=5 // pred_fallthru
        _
      %p171 = scmp.le.s32.totalorder 1, %s11
      %p172 = scmp.lt.s32.totalorder %s11, 9
      %p173 = pnand %p171, %p172
      %p174 = pneg %p173
      // Predicated region
      $region33: #{tpu_custom_call.1} parent=5 // pred_check
        _
      $region34: #{tpu_custom_call.1} parent=5 // pred_check_branch
        %176 = sbr.rel (%p173) target = $region36
      $region35: #{tpu_custom_call.1} parent=5 // pred_region
        %s177 = ssub.s32 %s11, 1
        %s178 = smul.u32 4, %s20
        %p179 = scmp.lt.s32.totalorder %s178, 7
        %s180 = scalar_select %p179, %s178, 7
        %s181 = smul.addr %s180, 2
        %s182 = smul.addr %s181, 8
        %s183 = scalar_lea.vmem %s0, %s182
        %p184 = pneg %p49
        %p185 = pneg %p46
        %p186 = pneg %p70
        %p187 = pneg %p67
        %p188 = pneg %p91
        %p189 = pneg %p88
        %p190 = pneg %p112
        %p191 = pneg %p109
        %p192 = pneg %p133
        %p193 = pneg %p130
        %s194 = smul.u32 4, %s20
        %p195 = scmp.lt.s32.totalorder %s194, 7
        %s196 = scalar_select %p195, %s194, 7
        %s197 = smul.addr %s196, 2
        %s198 = smul.addr %s197, 8
        %s199 = scalar_lea.vmem %s0, %s198
        %s200 = smul.u32 4, %s20
        %p203 = scmp.eq.s32.totalorder %s20, 0
        %p204 = scmp.eq.s32.totalorder %s21, 0
        %p205 = pnand %p203, %p204
        %p206 = pneg %p205
        // Predicated region
        $region37: #{tpu_custom_call.1} parent=35 // pred_check
          _
        $region38: #{tpu_custom_call.1} parent=35 // pred_check_branch
          %208 = sbr.rel (%p205) target = $region40
        $region39: #{tpu_custom_call.1} parent=35 // pred_region
          %vm209 = vcmask 0
          %210 = vst.msk [vmem:[#allocation4] sm:$0x1] %vm209, 0.0
          %v211 = vld [vmem:[%s1] sm:$0xff]
          %v212 = vld [vmem:[%s1 + $0x8] sm:$0xff]
          %v213 = vld [vmem:[%s1 + $0x10] sm:$0xff]
          %v214 = vld [vmem:[%s1 + $0x18] sm:$0xff]
          %v215 = vld [vmem:[%s1 + $0x20] sm:$0xff]
          %v216 = vld [vmem:[%s1 + $0x28] sm:$0xff]
          %v217 = vld [vmem:[%s1 + $0x30] sm:$0xff]
          %v218 = vld [vmem:[%s1 + $0x38] sm:$0xff]
          %v219 = vld [vmem:[%s1 + $0x40] sm:$0xff]
          %v220 = vld [vmem:[%s1 + $0x48] sm:$0xff]
          %v221 = vld [vmem:[%s1 + $0x50] sm:$0xff]
          %v222 = vld [vmem:[%s1 + $0x58] sm:$0xff]
          %v223 = vld [vmem:[%s1 + $0x60] sm:$0xff]
          %v224 = vld [vmem:[%s1 + $0x68] sm:$0xff]
          %v225 = vld [vmem:[%s1 + $0x70] sm:$0xff]
          %v226 = vld [vmem:[%s1 + $0x78] sm:$0xff]
          %v227 = vld [vmem:[%s1 + $0x80] sm:$0xff]
          %v228 = vld [vmem:[%s1 + $0x88] sm:$0xff]
          %v229 = vld [vmem:[%s1 + $0x90] sm:$0xff]
          %v230 = vld [vmem:[%s1 + $0x98] sm:$0xff]
          %v231 = vld [vmem:[%s1 + $0xa0] sm:$0xff]
          %v232 = vld [vmem:[%s1 + $0xa8] sm:$0xff]
          %v233 = vld [vmem:[%s1 + $0xb0] sm:$0xff]
          %v234 = vld [vmem:[%s1 + $0xb8] sm:$0xff]
          %v235 = vld [vmem:[%s1 + $0xc0] sm:$0xff]
          %v236 = vld [vmem:[%s1 + $0xc8] sm:$0xff]
          %v237 = vld [vmem:[%s1 + $0xd0] sm:$0xff]
          %v238 = vld [vmem:[%s1 + $0xd8] sm:$0xff]
          %v239 = vld [vmem:[%s1 + $0xe0] sm:$0xff]
          %v240 = vld [vmem:[%s1 + $0xe8] sm:$0xff]
          %v241 = vld [vmem:[%s1 + $0xf0] sm:$0xff]
          %v242 = vld [vmem:[%s1 + $0xf8] sm:$0xff]
          %v243 = vld [vmem:[%s2] sm:$0xff]
          %v244 = vld [vmem:[%s2 + $0x8] sm:$0xff]
          %v245 = vld [vmem:[%s2 + $0x10] sm:$0xff]
          %v246 = vld [vmem:[%s2 + $0x18] sm:$0xff]
          %vm247 = vcmask 261120
          %v249 = vsel %vm247, %v211, 0
          %v252 = vsel %vm247, %v212, 0
          %v255 = vsel %vm247, %v213, 0
          %v258 = vsel %vm247, %v214, 0
          %v261 = vsel %vm247, %v215, 0
          %v264 = vsel %vm247, %v216, 0
          %v267 = vsel %vm247, %v217, 0
          %v270 = vsel %vm247, %v218, 0
          %v273 = vsel %vm247, %v219, 0
          %v276 = vsel %vm247, %v220, 0
          %v279 = vsel %vm247, %v221, 0
          %v282 = vsel %vm247, %v222, 0
          %v285 = vsel %vm247, %v223, 0
          %v288 = vsel %vm247, %v224, 0
          %v291 = vsel %vm247, %v225, 0
          %v294 = vsel %vm247, %v226, 0
          %v297 = vsel %vm247, %v227, 0
          %v300 = vsel %vm247, %v228, 0
          %v303 = vsel %vm247, %v229, 0
          %v306 = vsel %vm247, %v230, 0
          %v309 = vsel %vm247, %v231, 0
          %v312 = vsel %vm247, %v232, 0
          %v315 = vsel %vm247, %v233, 0
          %v318 = vsel %vm247, %v234, 0
          %v321 = vsel %vm247, %v235, 0
          %v324 = vsel %vm247, %v236, 0
          %v327 = vsel %vm247, %v237, 0
          %v330 = vsel %vm247, %v238, 0
          %v333 = vsel %vm247, %v239, 0
          %v336 = vsel %vm247, %v240, 0
          %v339 = vsel %vm247, %v241, 0
          %v342 = vsel %vm247, %v242, 0
          %344 = vmatpush.msra.mxu0 0.0
          %345 = vmatpush.msra.mxu0 0.0
          %346 = vmatpush.msra.mxu0 0.0
          %347 = vmatpush.msra.mxu0 0.0
          %348 = vmatpush.msra.mxu0 0.0
          %349 = vmatpush.msra.mxu0 0.0
          %350 = vmatpush.msra.mxu0 0.0
          %351 = vmatpush.msra.mxu0 0.0
          %352 = vmatpush.msra.mxu0 0.0
          %353 = vmatpush.msra.mxu0 0.0
          %354 = vmatpush.msra.mxu0 0.0
          %355 = vmatpush.msra.mxu0 0.0
          %356 = vmatpush.msra.mxu0 %v246
          %357 = vmatpush.msra.mxu0 %v245
          %358 = vmatpush.msra.mxu0 %v244
          %359 = vmatpush.msra.mxu0 %v243
          %360 = vmatmul.f32.gmra.mxu0 %v249
          %v361 = vpop.f32.mrf.mxu0
          %v362 = vadd.f32 0.0, %v361
          %363 = vmatmul.f32.gmra.mxu0 %v252
          %v364 = vpop.f32.mrf.mxu0
          %v365 = vadd.f32 0.0, %v364
          %366 = vmatmul.f32.gmra.mxu0 %v255
          %v367 = vpop.f32.mrf.mxu0
          %v368 = vadd.f32 0.0, %v367
          %369 = vmatmul.f32.gmra.mxu0 %v258
          %v370 = vpop.f32.mrf.mxu0
          %v371 = vadd.f32 0.0, %v370
          %372 = vmatmul.f32.gmra.mxu0 %v261
          %v373 = vpop.f32.mrf.mxu0
          %v374 = vadd.f32 0.0, %v373
          %375 = vmatmul.f32.gmra.mxu0 %v264
          %v376 = vpop.f32.mrf.mxu0
          %v377 = vadd.f32 0.0, %v376
          %378 = vmatmul.f32.gmra.mxu0 %v267
          %v379 = vpop.f32.mrf.mxu0
          %v380 = vadd.f32 0.0, %v379
          %381 = vmatmul.f32.gmra.mxu0 %v270
          %v382 = vpop.f32.mrf.mxu0
          %v383 = vadd.f32 0.0, %v382
          %384 = vmatmul.f32.gmra.mxu0 %v273
          %v385 = vpop.f32.mrf.mxu0
          %v386 = vadd.f32 0.0, %v385
          %387 = vmatmul.f32.gmra.mxu0 %v276
          %v388 = vpop.f32.mrf.mxu0
          %v389 = vadd.f32 0.0, %v388
          %390 = vmatmul.f32.gmra.mxu0 %v279
          %v391 = vpop.f32.mrf.mxu0
          %v392 = vadd.f32 0.0, %v391
          %393 = vmatmul.f32.gmra.mxu0 %v282
          %v394 = vpop.f32.mrf.mxu0
          %v395 = vadd.f32 0.0, %v394
          %396 = vmatmul.f32.gmra.mxu0 %v285
          %v397 = vpop.f32.mrf.mxu0
          %v398 = vadd.f32 0.0, %v397
          %399 = vmatmul.f32.gmra.mxu0 %v288
          %v400 = vpop.f32.mrf.mxu0
          %v401 = vadd.f32 0.0, %v400
          %402 = vmatmul.f32.gmra.mxu0 %v291
          %v403 = vpop.f32.mrf.mxu0
          %v404 = vadd.f32 0.0, %v403
          %405 = vmatmul.f32.gmra.mxu0 %v294
          %v406 = vpop.f32.mrf.mxu0
          %v407 = vadd.f32 0.0, %v406
          %408 = vmatmul.f32.gmra.mxu0 %v297
          %v409 = vpop.f32.mrf.mxu0
          %v410 = vadd.f32 0.0, %v409
          %411 = vmatmul.f32.gmra.mxu0 %v300
          %v412 = vpop.f32.mrf.mxu0
          %v413 = vadd.f32 0.0, %v412
          %414 = vmatmul.f32.gmra.mxu0 %v303
          %v415 = vpop.f32.mrf.mxu0
          %v416 = vadd.f32 0.0, %v415
          %417 = vmatmul.f32.gmra.mxu0 %v306
          %v418 = vpop.f32.mrf.mxu0
          %v419 = vadd.f32 0.0, %v418
          %420 = vmatmul.f32.gmra.mxu0 %v309
          %v421 = vpop.f32.mrf.mxu0
          %v422 = vadd.f32 0.0, %v421
          %423 = vmatmul.f32.gmra.mxu0 %v312
          %v424 = vpop.f32.mrf.mxu0
          %v425 = vadd.f32 0.0, %v424
          %426 = vmatmul.f32.gmra.mxu0 %v315
          %v427 = vpop.f32.mrf.mxu0
          %v428 = vadd.f32 0.0, %v427
          %429 = vmatmul.f32.gmra.mxu0 %v318
          %v430 = vpop.f32.mrf.mxu0
          %v431 = vadd.f32 0.0, %v430
          %432 = vmatmul.f32.gmra.mxu0 %v321
          %v433 = vpop.f32.mrf.mxu0
          %v434 = vadd.f32 0.0, %v433
          %435 = vmatmul.f32.gmra.mxu0 %v324
          %v436 = vpop.f32.mrf.mxu0
          %v437 = vadd.f32 0.0, %v436
          %438 = vmatmul.f32.gmra.mxu0 %v327
          %v439 = vpop.f32.mrf.mxu0
          %v440 = vadd.f32 0.0, %v439
          %441 = vmatmul.f32.gmra.mxu0 %v330
          %v442 = vpop.f32.mrf.mxu0
          %v443 = vadd.f32 0.0, %v442
          %444 = vmatmul.f32.gmra.mxu0 %v333
          %v445 = vpop.f32.mrf.mxu0
          %v446 = vadd.f32 0.0, %v445
          %447 = vmatmul.f32.gmra.mxu0 %v336
          %v448 = vpop.f32.mrf.mxu0
          %v449 = vadd.f32 0.0, %v448
          %450 = vmatmul.f32.gmra.mxu0 %v339
          %v451 = vpop.f32.mrf.mxu0
          %v452 = vadd.f32 0.0, %v451
          %453 = vmatmul.f32.gmra.mxu0 %v342
          %v454 = vpop.f32.mrf.mxu0
          %v455 = vadd.f32 0.0, %v454
          %456 = vdwg.mxu0
          %v457 = vpack.c.bf16 %v362, %v362
          %v458 = vpack.c.bf16 %v365, %v365
          %v459 = vpack.c.bf16 %v368, %v368
          %v460 = vpack.c.bf16 %v371, %v371
          %v461 = vpack.c.bf16 %v374, %v374
          %v462 = vpack.c.bf16 %v377, %v377
          %v463 = vpack.c.bf16 %v380, %v380
          %v464 = vpack.c.bf16 %v383, %v383
          %v465 = vpack.c.bf16 %v386, %v386
          %v466 = vpack.c.bf16 %v389, %v389
          %v467 = vpack.c.bf16 %v392, %v392
          %v468 = vpack.c.bf16 %v395, %v395
          %v469 = vpack.c.bf16 %v398, %v398
          %v470 = vpack.c.bf16 %v401, %v401
          %v471 = vpack.c.bf16 %v404, %v404
          %v472 = vpack.c.bf16 %v407, %v407
          %v473 = vpack.c.bf16 %v410, %v410
          %v474 = vpack.c.bf16 %v413, %v413
          %v475 = vpack.c.bf16 %v416, %v416
          %v476 = vpack.c.bf16 %v419, %v419
          %v477 = vpack.c.bf16 %v422, %v422
          %v478 = vpack.c.bf16 %v425, %v425
          %v479 = vpack.c.bf16 %v428, %v428
          %v480 = vpack.c.bf16 %v431, %v431
          %v481 = vpack.c.bf16 %v434, %v434
          %v482 = vpack.c.bf16 %v437, %v437
          %v483 = vpack.c.bf16 %v440, %v440
          %v484 = vpack.c.bf16 %v443, %v443
          %v485 = vpack.c.bf16 %v446, %v446
          %v486 = vpack.c.bf16 %v449, %v449
          %v487 = vpack.c.bf16 %v452, %v452
          %v488 = vpack.c.bf16 %v455, %v455
          %489 = vst [vmem:[#allocation2] sm:$0xf] %v457
          %490 = vst [vmem:[#allocation2 + $0x4] sm:$0xf] %v458
          %491 = vst [vmem:[#allocation2 + $0x8] sm:$0xf] %v459
          %492 = vst [vmem:[#allocation2 + $0xc] sm:$0xf] %v460
          %493 = vst [vmem:[#allocation2 + $0x10] sm:$0xf] %v461
          %494 = vst [vmem:[#allocation2 + $0x14] sm:$0xf] %v462
          %495 = vst [vmem:[#allocation2 + $0x18] sm:$0xf] %v463
          %496 = vst [vmem:[#allocation2 + $0x1c] sm:$0xf] %v464
          %497 = vst [vmem:[#allocation2 + $0x20] sm:$0xf] %v465
          %498 = vst [vmem:[#allocation2 + $0x24] sm:$0xf] %v466
          %499 = vst [vmem:[#allocation2 + $0x28] sm:$0xf] %v467
          %500 = vst [vmem:[#allocation2 + $0x2c] sm:$0xf] %v468
          %501 = vst [vmem:[#allocation2 + $0x30] sm:$0xf] %v469
          %502 = vst [vmem:[#allocation2 + $0x34] sm:$0xf] %v470
          %503 = vst [vmem:[#allocation2 + $0x38] sm:$0xf] %v471
          %504 = vst [vmem:[#allocation2 + $0x3c] sm:$0xf] %v472
          %505 = vst [vmem:[#allocation2 + $0x40] sm:$0xf] %v473
          %506 = vst [vmem:[#allocation2 + $0x44] sm:$0xf] %v474
          %507 = vst [vmem:[#allocation2 + $0x48] sm:$0xf] %v475
          %508 = vst [vmem:[#allocation2 + $0x4c] sm:$0xf] %v476
          %509 = vst [vmem:[#allocation2 + $0x50] sm:$0xf] %v477
          %510 = vst [vmem:[#allocation2 + $0x54] sm:$0xf] %v478
          %511 = vst [vmem:[#allocation2 + $0x58] sm:$0xf] %v479
          %512 = vst [vmem:[#allocation2 + $0x5c] sm:$0xf] %v480
          %513 = vst [vmem:[#allocation2 + $0x60] sm:$0xf] %v481
          %514 = vst [vmem:[#allocation2 + $0x64] sm:$0xf] %v482
          %515 = vst [vmem:[#allocation2 + $0x68] sm:$0xf] %v483
          %516 = vst [vmem:[#allocation2 + $0x6c] sm:$0xf] %v484
          %517 = vst [vmem:[#allocation2 + $0x70] sm:$0xf] %v485
          %518 = vst [vmem:[#allocation2 + $0x74] sm:$0xf] %v486
          %519 = vst [vmem:[#allocation2 + $0x78] sm:$0xf] %v487
          %520 = vst [vmem:[#allocation2 + $0x7c] sm:$0xf] %v488
          %v521 = vld [vmem:[%s3] sm:$0x1]
          %522 = vmatpush.xpose.msra.mxu0 %v407
          %523 = vmatpush.xpose.msra.mxu0 %v404
          %524 = vmatpush.xpose.msra.mxu0 %v401
          %525 = vmatpush.xpose.msra.mxu0 %v398
          %526 = vmatpush.xpose.msra.mxu0 %v395
          %527 = vmatpush.xpose.msra.mxu0 %v392
          %528 = vmatpush.xpose.msra.mxu0 %v389
          %529 = vmatpush.xpose.msra.mxu0 %v386
          %530 = vmatpush.xpose.msra.mxu0 %v383
          %531 = vmatpush.xpose.msra.mxu0 %v380
          %532 = vmatpush.xpose.msra.mxu0 %v377
          %533 = vmatpush.xpose.msra.mxu0 %v374
          %534 = vmatpush.xpose.msra.mxu0 %v371
          %535 = vmatpush.xpose.msra.mxu0 %v368
          %536 = vmatpush.xpose.msra.mxu0 %v365
          %537 = vmatpush.xpose.msra.mxu0 %v362
          %538 = vmatmul.f32.gmra.mxu0 %v521
          %v539 = vpop.f32.mrf.mxu0
          %v540 = vadd.f32 0.0, %v539
          %541 = vdwg.mxu0
          %542 = vmatpush.xpose.msra.mxu0 %v455
          %543 = vmatpush.xpose.msra.mxu0 %v452
          %544 = vmatpush.xpose.msra.mxu0 %v449
          %545 = vmatpush.xpose.msra.mxu0 %v446
          %546 = vmatpush.xpose.msra.mxu0 %v443
          %547 = vmatpush.xpose.msra.mxu0 %v440
          %548 = vmatpush.xpose.msra.mxu0 %v437
          %549 = vmatpush.xpose.msra.mxu0 %v434
          %550 = vmatpush.xpose.msra.mxu0 %v431
          %551 = vmatpush.xpose.msra.mxu0 %v428
          %552 = vmatpush.xpose.msra.mxu0 %v425
          %553 = vmatpush.xpose.msra.mxu0 %v422
          %554 = vmatpush.xpose.msra.mxu0 %v419
          %555 = vmatpush.xpose.msra.mxu0 %v416
          %556 = vmatpush.xpose.msra.mxu0 %v413
          %557 = vmatpush.xpose.msra.mxu0 %v410
          %558 = vmatmul.f32.gmra.mxu0 %v521
          %v559 = vpop.f32.mrf.mxu0
          %v560 = vadd.f32 0.0, %v559
          %561 = vdwg.mxu0
          %v564 = vrot.slane %v560, 7
          %vm565 = vcmask 1040384
          %v566 = vsel %vm565, %v540, %v564
          %v568 = vlaneseq
          %vm569 = vcmp.ge.s32.totalorder %v568, 0
          %vm570 = vcmp.lt.s32.totalorder %v568, 256
          %vm571 = vmand %vm569, %vm570
          %572 = vst.msk [vmem:[#allocation3] ss:$4 sm:$0x3] %vm571, %v566
          %s573 = scalar_lea.vmem %s2, 32
          %v574 = vld [vmem:[%s573] sm:$0xff]
          %v575 = vld [vmem:[%s573 + $0x8] sm:$0xff]
          %v576 = vld [vmem:[%s573 + $0x10] sm:$0xff]
          %v577 = vld [vmem:[%s573 + $0x18] sm:$0xff]
          %578 = vmatpush.msra.mxu0 0.0
          %579 = vmatpush.msra.mxu0 0.0
          %580 = vmatpush.msra.mxu0 0.0
          %581 = vmatpush.msra.mxu0 0.0
          %582 = vmatpush.msra.mxu0 0.0
          %583 = vmatpush.msra.mxu0 0.0
          %584 = vmatpush.msra.mxu0 0.0
          %585 = vmatpush.msra.mxu0 0.0
          %586 = vmatpush.msra.mxu0 0.0
          %587 = vmatpush.msra.mxu0 0.0
          %588 = vmatpush.msra.mxu0 0.0
          %589 = vmatpush.msra.mxu0 0.0
          %590 = vmatpush.msra.mxu0 %v577
          %591 = vmatpush.msra.mxu0 %v576
          %592 = vmatpush.msra.mxu0 %v575
          %593 = vmatpush.msra.mxu0 %v574
          %594 = vmatmul.f32.gmra.mxu0 %v249
          %v595 = vpop.f32.mrf.mxu0
          %v596 = vadd.f32 0.0, %v595
          %597 = vmatmul.f32.gmra.mxu0 %v252
          %v598 = vpop.f32.mrf.mxu0
          %v599 = vadd.f32 0.0, %v598
          %600 = vmatmul.f32.gmra.mxu0 %v255
          %v601 = vpop.f32.mrf.mxu0
          %v602 = vadd.f32 0.0, %v601
          %603 = vmatmul.f32.gmra.mxu0 %v258
          %v604 = vpop.f32.mrf.mxu0
          %v605 = vadd.f32 0.0, %v604
          %606 = vmatmul.f32.gmra.mxu0 %v261
          %v607 = vpop.f32.mrf.mxu0
          %v608 = vadd.f32 0.0, %v607
          %609 = vmatmul.f32.gmra.mxu0 %v264
          %v610 = vpop.f32.mrf.mxu0
          %v611 = vadd.f32 0.0, %v610
          %612 = vmatmul.f32.gmra.mxu0 %v267
          %v613 = vpop.f32.mrf.mxu0
          %v614 = vadd.f32 0.0, %v613
          %615 = vmatmul.f32.gmra.mxu0 %v270
          %v616 = vpop.f32.mrf.mxu0
          %v617 = vadd.f32 0.0, %v616
          %618 = vmatmul.f32.gmra.mxu0 %v273
          %v619 = vpop.f32.mrf.mxu0
          %v620 = vadd.f32 0.0, %v619
          %621 = vmatmul.f32.gmra.mxu0 %v276
          %v622 = vpop.f32.mrf.mxu0
          %v623 = vadd.f32 0.0, %v622
          %624 = vmatmul.f32.gmra.mxu0 %v279
          %v625 = vpop.f32.mrf.mxu0
          %v626 = vadd.f32 0.0, %v625
          %627 = vmatmul.f32.gmra.mxu0 %v282
          %v628 = vpop.f32.mrf.mxu0
          %v629 = vadd.f32 0.0, %v628
          %630 = vmatmul.f32.gmra.mxu0 %v285
          %v631 = vpop.f32.mrf.mxu0
          %v632 = vadd.f32 0.0, %v631
          %633 = vmatmul.f32.gmra.mxu0 %v288
          %v634 = vpop.f32.mrf.mxu0
          %v635 = vadd.f32 0.0, %v634
          %636 = vmatmul.f32.gmra.mxu0 %v291
          %v637 = vpop.f32.mrf.mxu0
          %v638 = vadd.f32 0.0, %v637
          %639 = vmatmul.f32.gmra.mxu0 %v294
          %v640 = vpop.f32.mrf.mxu0
          %v641 = vadd.f32 0.0, %v640
          %642 = vmatmul.f32.gmra.mxu0 %v297
          %v643 = vpop.f32.mrf.mxu0
          %v644 = vadd.f32 0.0, %v643
          %645 = vmatmul.f32.gmra.mxu0 %v300
          %v646 = vpop.f32.mrf.mxu0
          %v647 = vadd.f32 0.0, %v646
          %648 = vmatmul.f32.gmra.mxu0 %v303
          %v649 = vpop.f32.mrf.mxu0
          %v650 = vadd.f32 0.0, %v649
          %651 = vmatmul.f32.gmra.mxu0 %v306
          %v652 = vpop.f32.mrf.mxu0
          %v653 = vadd.f32 0.0, %v652
          %654 = vmatmul.f32.gmra.mxu0 %v309
          %v655 = vpop.f32.mrf.mxu0
          %v656 = vadd.f32 0.0, %v655
          %657 = vmatmul.f32.gmra.mxu0 %v312
          %v658 = vpop.f32.mrf.mxu0
          %v659 = vadd.f32 0.0, %v658
          %660 = vmatmul.f32.gmra.mxu0 %v315
          %v661 = vpop.f32.mrf.mxu0
          %v662 = vadd.f32 0.0, %v661
          %663 = vmatmul.f32.gmra.mxu0 %v318
          %v664 = vpop.f32.mrf.mxu0
          %v665 = vadd.f32 0.0, %v664
          %666 = vmatmul.f32.gmra.mxu0 %v321
          %v667 = vpop.f32.mrf.mxu0
          %v668 = vadd.f32 0.0, %v667
          %669 = vmatmul.f32.gmra.mxu0 %v324
          %v670 = vpop.f32.mrf.mxu0
          %v671 = vadd.f32 0.0, %v670
          %672 = vmatmul.f32.gmra.mxu0 %v327
          %v673 = vpop.f32.mrf.mxu0
          %v674 = vadd.f32 0.0, %v673
          %675 = vmatmul.f32.gmra.mxu0 %v330
          %v676 = vpop.f32.mrf.mxu0
          %v677 = vadd.f32 0.0, %v676
          %678 = vmatmul.f32.gmra.mxu0 %v333
          %v679 = vpop.f32.mrf.mxu0
          %v680 = vadd.f32 0.0, %v679
          %681 = vmatmul.f32.gmra.mxu0 %v336
          %v682 = vpop.f32.mrf.mxu0
          %v683 = vadd.f32 0.0, %v682
          %684 = vmatmul.f32.gmra.mxu0 %v339
          %v685 = vpop.f32.mrf.mxu0
          %v686 = vadd.f32 0.0, %v685
          %687 = vmatmul.f32.gmra.mxu0 %v342
          %v688 = vpop.f32.mrf.mxu0
          %v689 = vadd.f32 0.0, %v688
          %690 = vdwg.mxu0
          %v691 = vpack.c.bf16 %v596, %v596
          %v692 = vpack.c.bf16 %v599, %v599
          %v693 = vpack.c.bf16 %v602, %v602
          %v694 = vpack.c.bf16 %v605, %v605
          %v695 = vpack.c.bf16 %v608, %v608
          %v696 = vpack.c.bf16 %v611, %v611
          %v697 = vpack.c.bf16 %v614, %v614
          %v698 = vpack.c.bf16 %v617, %v617
          %v699 = vpack.c.bf16 %v620, %v620
          %v700 = vpack.c.bf16 %v623, %v623
          %v701 = vpack.c.bf16 %v626, %v626
          %v702 = vpack.c.bf16 %v629, %v629
          %v703 = vpack.c.bf16 %v632, %v632
          %v704 = vpack.c.bf16 %v635, %v635
          %v705 = vpack.c.bf16 %v638, %v638
          %v706 = vpack.c.bf16 %v641, %v641
          %v707 = vpack.c.bf16 %v644, %v644
          %v708 = vpack.c.bf16 %v647, %v647
          %v709 = vpack.c.bf16 %v650, %v650
          %v710 = vpack.c.bf16 %v653, %v653
          %v711 = vpack.c.bf16 %v656, %v656
          %v712 = vpack.c.bf16 %v659, %v659
          %v713 = vpack.c.bf16 %v662, %v662
          %v714 = vpack.c.bf16 %v665, %v665
          %v715 = vpack.c.bf16 %v668, %v668
          %v716 = vpack.c.bf16 %v671, %v671
          %v717 = vpack.c.bf16 %v674, %v674
          %v718 = vpack.c.bf16 %v677, %v677
          %v719 = vpack.c.bf16 %v680, %v680
          %v720 = vpack.c.bf16 %v683, %v683
          %v721 = vpack.c.bf16 %v686, %v686
          %v722 = vpack.c.bf16 %v689, %v689
          %723 = vst [vmem:[#allocation2 + $0x80] sm:$0xf] %v691
          %724 = vst [vmem:[#allocation2 + $0x84] sm:$0xf] %v692
          %725 = vst [vmem:[#allocation2 + $0x88] sm:$0xf] %v693
          %726 = vst [vmem:[#allocation2 + $0x8c] sm:$0xf] %v694
          %727 = vst [vmem:[#allocation2 + $0x90] sm:$0xf] %v695
          %728 = vst [vmem:[#allocation2 + $0x94] sm:$0xf] %v696
          %729 = vst [vmem:[#allocation2 + $0x98] sm:$0xf] %v697
          %730 = vst [vmem:[#allocation2 + $0x9c] sm:$0xf] %v698
          %731 = vst [vmem:[#allocation2 + $0xa0] sm:$0xf] %v699
          %732 = vst [vmem:[#allocation2 + $0xa4] sm:$0xf] %v700
          %733 = vst [vmem:[#allocation2 + $0xa8] sm:$0xf] %v701
          %734 = vst [vmem:[#allocation2 + $0xac] sm:$0xf] %v702
          %735 = vst [vmem:[#allocation2 + $0xb0] sm:$0xf] %v703
          %736 = vst [vmem:[#allocation2 + $0xb4] sm:$0xf] %v704
          %737 = vst [vmem:[#allocation2 + $0xb8] sm:$0xf] %v705
          %738 = vst [vmem:[#allocation2 + $0xbc] sm:$0xf] %v706
          %739 = vst [vmem:[#allocation2 + $0xc0] sm:$0xf] %v707
          %740 = vst [vmem:[#allocation2 + $0xc4] sm:$0xf] %v708
          %741 = vst [vmem:[#allocation2 + $0xc8] sm:$0xf] %v709
          %742 = vst [vmem:[#allocation2 + $0xcc] sm:$0xf] %v710
          %743 = vst [vmem:[#allocation2 + $0xd0] sm:$0xf] %v711
          %744 = vst [vmem:[#allocation2 + $0xd4] sm:$0xf] %v712
          %745 = vst [vmem:[#allocation2 + $0xd8] sm:$0xf] %v713
          %746 = vst [vmem:[#allocation2 + $0xdc] sm:$0xf] %v714
          %747 = vst [vmem:[#allocation2 + $0xe0] sm:$0xf] %v715
          %748 = vst [vmem:[#allocation2 + $0xe4] sm:$0xf] %v716
          %749 = vst [vmem:[#allocation2 + $0xe8] sm:$0xf] %v717
          %750 = vst [vmem:[#allocation2 + $0xec] sm:$0xf] %v718
          %751 = vst [vmem:[#allocation2 + $0xf0] sm:$0xf] %v719
          %752 = vst [vmem:[#allocation2 + $0xf4] sm:$0xf] %v720
          %753 = vst [vmem:[#allocation2 + $0xf8] sm:$0xf] %v721
          %754 = vst [vmem:[#allocation2 + $0xfc] sm:$0xf] %v722
          %v755 = vld [vmem:[%s3 + $0x2] sm:$0x1]
          %756 = vmatpush.xpose.msra.mxu0 %v641
          %757 = vmatpush.xpose.msra.mxu0 %v638
          %758 = vmatpush.xpose.msra.mxu0 %v635
          %759 = vmatpush.xpose.msra.mxu0 %v632
          %760 = vmatpush.xpose.msra.mxu0 %v629
          %761 = vmatpush.xpose.msra.mxu0 %v626
          %762 = vmatpush.xpose.msra.mxu0 %v623
          %763 = vmatpush.xpose.msra.mxu0 %v620
          %764 = vmatpush.xpose.msra.mxu0 %v617
          %765 = vmatpush.xpose.msra.mxu0 %v614
          %766 = vmatpush.xpose.msra.mxu0 %v611
          %767 = vmatpush.xpose.msra.mxu0 %v608
          %768 = vmatpush.xpose.msra.mxu0 %v605
          %769 = vmatpush.xpose.msra.mxu0 %v602
          %770 = vmatpush.xpose.msra.mxu0 %v599
          %771 = vmatpush.xpose.msra.mxu0 %v596
          %772 = vmatmul.f32.gmra.mxu0 %v755
          %v773 = vpop.f32.mrf.mxu0
          %v774 = vadd.f32 0.0, %v773
          %775 = vdwg.mxu0
          %776 = vmatpush.xpose.msra.mxu0 %v689
          %777 = vmatpush.xpose.msra.mxu0 %v686
          %778 = vmatpush.xpose.msra.mxu0 %v683
          %779 = vmatpush.xpose.msra.mxu0 %v680
          %780 = vmatpush.xpose.msra.mxu0 %v677
          %781 = vmatpush.xpose.msra.mxu0 %v674
          %782 = vmatpush.xpose.msra.mxu0 %v671
          %783 = vmatpush.xpose.msra.mxu0 %v668
          %784 = vmatpush.xpose.msra.mxu0 %v665
          %785 = vmatpush.xpose.msra.mxu0 %v662
          %786 = vmatpush.xpose.msra.mxu0 %v659
          %787 = vmatpush.xpose.msra.mxu0 %v656
          %788 = vmatpush.xpose.msra.mxu0 %v653
          %789 = vmatpush.xpose.msra.mxu0 %v650
          %790 = vmatpush.xpose.msra.mxu0 %v647
          %791 = vmatpush.xpose.msra.mxu0 %v644
          %792 = vmatmul.f32.gmra.mxu0 %v755
          %v793 = vpop.f32.mrf.mxu0
          %v794 = vadd.f32 0.0, %v793
          %795 = vdwg.mxu0
          %v798 = vrot.slane %v794, 7
          %v799 = vsel %vm565, %v774, %v798
          %s801 = scalar_lea.vmem [#allocation3], 1
          %802 = vst.msk [vmem:[%s801] ss:$4 sm:$0x3] %vm571, %v799
          %s803 = scalar_lea.vmem %s2, 64
          %v804 = vld [vmem:[%s803] sm:$0xff]
          %v805 = vld [vmem:[%s803 + $0x8] sm:$0xff]
          %v806 = vld [vmem:[%s803 + $0x10] sm:$0xff]
          %v807 = vld [vmem:[%s803 + $0x18] sm:$0xff]
          %808 = vmatpush.msra.mxu0 0.0
          %809 = vmatpush.msra.mxu0 0.0
          %810 = vmatpush.msra.mxu0 0.0
          %811 = vmatpush.msra.mxu0 0.0
          %812 = vmatpush.msra.mxu0 0.0
          %813 = vmatpush.msra.mxu0 0.0
          %814 = vmatpush.msra.mxu0 0.0
          %815 = vmatpush.msra.mxu0 0.0
          %816 = vmatpush.msra.mxu0 0.0
          %817 = vmatpush.msra.mxu0 0.0
          %818 = vmatpush.msra.mxu0 0.0
          %819 = vmatpush.msra.mxu0 0.0
          %820 = vmatpush.msra.mxu0 %v807
          %821 = vmatpush.msra.mxu0 %v806
          %822 = vmatpush.msra.mxu0 %v805
          %823 = vmatpush.msra.mxu0 %v804
          %824 = vmatmul.f32.gmra.mxu0 %v249
          %v825 = vpop.f32.mrf.mxu0
          %v826 = vadd.f32 0.0, %v825
          %827 = vmatmul.f32.gmra.mxu0 %v252
          %v828 = vpop.f32.mrf.mxu0
          %v829 = vadd.f32 0.0, %v828
          %830 = vmatmul.f32.gmra.mxu0 %v255
          %v831 = vpop.f32.mrf.mxu0
          %v832 = vadd.f32 0.0, %v831
          %833 = vmatmul.f32.gmra.mxu0 %v258
          %v834 = vpop.f32.mrf.mxu0
          %v835 = vadd.f32 0.0, %v834
          %836 = vmatmul.f32.gmra.mxu0 %v261
          %v837 = vpop.f32.mrf.mxu0
          %v838 = vadd.f32 0.0, %v837
          %839 = vmatmul.f32.gmra.mxu0 %v264
          %v840 = vpop.f32.mrf.mxu0
          %v841 = vadd.f32 0.0, %v840
          %842 = vmatmul.f32.gmra.mxu0 %v267
          %v843 = vpop.f32.mrf.mxu0
          %v844 = vadd.f32 0.0, %v843
          %845 = vmatmul.f32.gmra.mxu0 %v270
          %v846 = vpop.f32.mrf.mxu0
          %v847 = vadd.f32 0.0, %v846
          %848 = vmatmul.f32.gmra.mxu0 %v273
          %v849 = vpop.f32.mrf.mxu0
          %v850 = vadd.f32 0.0, %v849
          %851 = vmatmul.f32.gmra.mxu0 %v276
          %v852 = vpop.f32.mrf.mxu0
          %v853 = vadd.f32 0.0, %v852
          %854 = vmatmul.f32.gmra.mxu0 %v279
          %v855 = vpop.f32.mrf.mxu0
          %v856 = vadd.f32 0.0, %v855
          %857 = vmatmul.f32.gmra.mxu0 %v282
          %v858 = vpop.f32.mrf.mxu0
          %v859 = vadd.f32 0.0, %v858
          %860 = vmatmul.f32.gmra.mxu0 %v285
          %v861 = vpop.f32.mrf.mxu0
          %v862 = vadd.f32 0.0, %v861
          %863 = vmatmul.f32.gmra.mxu0 %v288
          %v864 = vpop.f32.mrf.mxu0
          %v865 = vadd.f32 0.0, %v864
          %866 = vmatmul.f32.gmra.mxu0 %v291
          %v867 = vpop.f32.mrf.mxu0
          %v868 = vadd.f32 0.0, %v867
          %869 = vmatmul.f32.gmra.mxu0 %v294
          %v870 = vpop.f32.mrf.mxu0
          %v871 = vadd.f32 0.0, %v870
          %872 = vmatmul.f32.gmra.mxu0 %v297
          %v873 = vpop.f32.mrf.mxu0
          %v874 = vadd.f32 0.0, %v873
          %875 = vmatmul.f32.gmra.mxu0 %v300
          %v876 = vpop.f32.mrf.mxu0
          %v877 = vadd.f32 0.0, %v876
          %878 = vmatmul.f32.gmra.mxu0 %v303
          %v879 = vpop.f32.mrf.mxu0
          %v880 = vadd.f32 0.0, %v879
          %881 = vmatmul.f32.gmra.mxu0 %v306
          %v882 = vpop.f32.mrf.mxu0
          %v883 = vadd.f32 0.0, %v882
          %884 = vmatmul.f32.gmra.mxu0 %v309
          %v885 = vpop.f32.mrf.mxu0
          %v886 = vadd.f32 0.0, %v885
          %887 = vmatmul.f32.gmra.mxu0 %v312
          %v888 = vpop.f32.mrf.mxu0
          %v889 = vadd.f32 0.0, %v888
          %890 = vmatmul.f32.gmra.mxu0 %v315
          %v891 = vpop.f32.mrf.mxu0
          %v892 = vadd.f32 0.0, %v891
          %893 = vmatmul.f32.gmra.mxu0 %v318
          %v894 = vpop.f32.mrf.mxu0
          %v895 = vadd.f32 0.0, %v894
          %896 = vmatmul.f32.gmra.mxu0 %v321
          %v897 = vpop.f32.mrf.mxu0
          %v898 = vadd.f32 0.0, %v897
          %899 = vmatmul.f32.gmra.mxu0 %v324
          %v900 = vpop.f32.mrf.mxu0
          %v901 = vadd.f32 0.0, %v900
          %902 = vmatmul.f32.gmra.mxu0 %v327
          %v903 = vpop.f32.mrf.mxu0
          %v904 = vadd.f32 0.0, %v903
          %905 = vmatmul.f32.gmra.mxu0 %v330
          %v906 = vpop.f32.mrf.mxu0
          %v907 = vadd.f32 0.0, %v906
          %908 = vmatmul.f32.gmra.mxu0 %v333
          %v909 = vpop.f32.mrf.mxu0
          %v910 = vadd.f32 0.0, %v909
          %911 = vmatmul.f32.gmra.mxu0 %v336
          %v912 = vpop.f32.mrf.mxu0
          %v913 = vadd.f32 0.0, %v912
          %914 = vmatmul.f32.gmra.mxu0 %v339
          %v915 = vpop.f32.mrf.mxu0
          %v916 = vadd.f32 0.0, %v915
          %917 = vmatmul.f32.gmra.mxu0 %v342
          %v918 = vpop.f32.mrf.mxu0
          %v919 = vadd.f32 0.0, %v918
          %920 = vdwg.mxu0
          %v921 = vpack.c.bf16 %v826, %v826
          %v922 = vpack.c.bf16 %v829, %v829
          %v923 = vpack.c.bf16 %v832, %v832
          %v924 = vpack.c.bf16 %v835, %v835
          %v925 = vpack.c.bf16 %v838, %v838
          %v926 = vpack.c.bf16 %v841, %v841
          %v927 = vpack.c.bf16 %v844, %v844
          %v928 = vpack.c.bf16 %v847, %v847
          %v929 = vpack.c.bf16 %v850, %v850
          %v930 = vpack.c.bf16 %v853, %v853
          %v931 = vpack.c.bf16 %v856, %v856
          %v932 = vpack.c.bf16 %v859, %v859
          %v933 = vpack.c.bf16 %v862, %v862
          %v934 = vpack.c.bf16 %v865, %v865
          %v935 = vpack.c.bf16 %v868, %v868
          %v936 = vpack.c.bf16 %v871, %v871
          %v937 = vpack.c.bf16 %v874, %v874
          %v938 = vpack.c.bf16 %v877, %v877
          %v939 = vpack.c.bf16 %v880, %v880
          %v940 = vpack.c.bf16 %v883, %v883
          %v941 = vpack.c.bf16 %v886, %v886
          %v942 = vpack.c.bf16 %v889, %v889
          %v943 = vpack.c.bf16 %v892, %v892
          %v944 = vpack.c.bf16 %v895, %v895
          %v945 = vpack.c.bf16 %v898, %v898
          %v946 = vpack.c.bf16 %v901, %v901
          %v947 = vpack.c.bf16 %v904, %v904
          %v948 = vpack.c.bf16 %v907, %v907
          %v949 = vpack.c.bf16 %v910, %v910
          %v950 = vpack.c.bf16 %v913, %v913
          %v951 = vpack.c.bf16 %v916, %v916
          %v952 = vpack.c.bf16 %v919, %v919
          %953 = vst [vmem:[#allocation2 + $0x100] sm:$0xf] %v921
          %954 = vst [vmem:[#allocation2 + $0x104] sm:$0xf] %v922
          %955 = vst [vmem:[#allocation2 + $0x108] sm:$0xf] %v923
          %956 = vst [vmem:[#allocation2 + $0x10c] sm:$0xf] %v924
          %957 = vst [vmem:[#allocation2 + $0x110] sm:$0xf] %v925
          %958 = vst [vmem:[#allocation2 + $0x114] sm:$0xf] %v926
          %959 = vst [vmem:[#allocation2 + $0x118] sm:$0xf] %v927
          %960 = vst [vmem:[#allocation2 + $0x11c] sm:$0xf] %v928
          %961 = vst [vmem:[#allocation2 + $0x120] sm:$0xf] %v929
          %962 = vst [vmem:[#allocation2 + $0x124] sm:$0xf] %v930
          %963 = vst [vmem:[#allocation2 + $0x128] sm:$0xf] %v931
          %964 = vst [vmem:[#allocation2 + $0x12c] sm:$0xf] %v932
          %965 = vst [vmem:[#allocation2 + $0x130] sm:$0xf] %v933
          %966 = vst [vmem:[#allocation2 + $0x134] sm:$0xf] %v934
          %967 = vst [vmem:[#allocation2 + $0x138] sm:$0xf] %v935
          %968 = vst [vmem:[#allocation2 + $0x13c] sm:$0xf] %v936
          %969 = vst [vmem:[#allocation2 + $0x140] sm:$0xf] %v937
          %970 = vst [vmem:[#allocation2 + $0x144] sm:$0xf] %v938
          %971 = vst [vmem:[#allocation2 + $0x148] sm:$0xf] %v939
          %972 = vst [vmem:[#allocation2 + $0x14c] sm:$0xf] %v940
          %973 = vst [vmem:[#allocation2 + $0x150] sm:$0xf] %v941
          %974 = vst [vmem:[#allocation2 + $0x154] sm:$0xf] %v942
          %975 = vst [vmem:[#allocation2 + $0x158] sm:$0xf] %v943
          %976 = vst [vmem:[#allocation2 + $0x15c] sm:$0xf] %v944
          %977 = vst [vmem:[#allocation2 + $0x160] sm:$0xf] %v945
          %978 = vst [vmem:[#allocation2 + $0x164] sm:$0xf] %v946
          %979 = vst [vmem:[#allocation2 + $0x168] sm:$0xf] %v947
          %980 = vst [vmem:[#allocation2 + $0x16c] sm:$0xf] %v948
          %981 = vst [vmem:[#allocation2 + $0x170] sm:$0xf] %v949
          %982 = vst [vmem:[#allocation2 + $0x174] sm:$0xf] %v950
          %983 = vst [vmem:[#allocation2 + $0x178] sm:$0xf] %v951
          %984 = vst [vmem:[#allocation2 + $0x17c] sm:$0xf] %v952
          %v985 = vld [vmem:[%s3 + $0x4] sm:$0x1]
          %986 = vmatpush.xpose.msra.mxu0 %v871
          %987 = vmatpush.xpose.msra.mxu0 %v868
          %988 = vmatpush.xpose.msra.mxu0 %v865
          %989 = vmatpush.xpose.msra.mxu0 %v862
          %990 = vmatpush.xpose.msra.mxu0 %v859
          %991 = vmatpush.xpose.msra.mxu0 %v856
          %992 = vmatpush.xpose.msra.mxu0 %v853
          %993 = vmatpush.xpose.msra.mxu0 %v850
          %994 = vmatpush.xpose.msra.mxu0 %v847
          %995 = vmatpush.xpose.msra.mxu0 %v844
          %996 = vmatpush.xpose.msra.mxu0 %v841
          %997 = vmatpush.xpose.msra.mxu0 %v838
          %998 = vmatpush.xpose.msra.mxu0 %v835
          %999 = vmatpush.xpose.msra.mxu0 %v832
          %1000 = vmatpush.xpose.msra.mxu0 %v829
          %1001 = vmatpush.xpose.msra.mxu0 %v826
          %1002 = vmatmul.f32.gmra.mxu0 %v985
          %v1003 = vpop.f32.mrf.mxu0
          %v1004 = vadd.f32 0.0, %v1003
          %1005 = vdwg.mxu0
          %1006 = vmatpush.xpose.msra.mxu0 %v919
          %1007 = vmatpush.xpose.msra.mxu0 %v916
          %1008 = vmatpush.xpose.msra.mxu0 %v913
          %1009 = vmatpush.xpose.msra.mxu0 %v910
          %1010 = vmatpush.xpose.msra.mxu0 %v907
          %1011 = vmatpush.xpose.msra.mxu0 %v904
          %1012 = vmatpush.xpose.msra.mxu0 %v901
          %1013 = vmatpush.xpose.msra.mxu0 %v898
          %1014 = vmatpush.xpose.msra.mxu0 %v895
          %1015 = vmatpush.xpose.msra.mxu0 %v892
          %1016 = vmatpush.xpose.msra.mxu0 %v889
          %1017 = vmatpush.xpose.msra.mxu0 %v886
          %1018 = vmatpush.xpose.msra.mxu0 %v883
          %1019 = vmatpush.xpose.msra.mxu0 %v880
          %1020 = vmatpush.xpose.msra.mxu0 %v877
          %1021 = vmatpush.xpose.msra.mxu0 %v874
          %1022 = vmatmul.f32.gmra.mxu0 %v985
          %v1023 = vpop.f32.mrf.mxu0
          %v1024 = vadd.f32 0.0, %v1023
          %1025 = vdwg.mxu0
          %v1028 = vrot.slane %v1024, 7
          %v1029 = vsel %vm565, %v1004, %v1028
          %s1031 = scalar_lea.vmem [#allocation3], 2
          %1032 = vst.msk [vmem:[%s1031] ss:$4 sm:$0x3] %vm571, %v1029
          %s1033 = scalar_lea.vmem %s2, 96
          %v1034 = vld [vmem:[%s1033] sm:$0xff]
          %v1035 = vld [vmem:[%s1033 + $0x8] sm:$0xff]
          %v1036 = vld [vmem:[%s1033 + $0x10] sm:$0xff]
          %v1037 = vld [vmem:[%s1033 + $0x18] sm:$0xff]
          %1038 = vmatpush.msra.mxu0 0.0
          %1039 = vmatpush.msra.mxu0 0.0
          %1040 = vmatpush.msra.mxu0 0.0
          %1041 = vmatpush.msra.mxu0 0.0
          %1042 = vmatpush.msra.mxu0 0.0
          %1043 = vmatpush.msra.mxu0 0.0
          %1044 = vmatpush.msra.mxu0 0.0
          %1045 = vmatpush.msra.mxu0 0.0
          %1046 = vmatpush.msra.mxu0 0.0
          %1047 = vmatpush.msra.mxu0 0.0
          %1048 = vmatpush.msra.mxu0 0.0
          %1049 = vmatpush.msra.mxu0 0.0
          %1050 = vmatpush.msra.mxu0 %v1037
          %1051 = vmatpush.msra.mxu0 %v1036
          %1052 = vmatpush.msra.mxu0 %v1035
          %1053 = vmatpush.msra.mxu0 %v1034
          %1054 = vmatmul.f32.gmra.mxu0 %v249
          %v1055 = vpop.f32.mrf.mxu0
          %v1056 = vadd.f32 0.0, %v1055
          %1057 = vmatmul.f32.gmra.mxu0 %v252
          %v1058 = vpop.f32.mrf.mxu0
          %v1059 = vadd.f32 0.0, %v1058
          %1060 = vmatmul.f32.gmra.mxu0 %v255
          %v1061 = vpop.f32.mrf.mxu0
          %v1062 = vadd.f32 0.0, %v1061
          %1063 = vmatmul.f32.gmra.mxu0 %v258
          %v1064 = vpop.f32.mrf.mxu0
          %v1065 = vadd.f32 0.0, %v1064
          %1066 = vmatmul.f32.gmra.mxu0 %v261
          %v1067 = vpop.f32.mrf.mxu0
          %v1068 = vadd.f32 0.0, %v1067
          %1069 = vmatmul.f32.gmra.mxu0 %v264
          %v1070 = vpop.f32.mrf.mxu0
          %v1071 = vadd.f32 0.0, %v1070
          %1072 = vmatmul.f32.gmra.mxu0 %v267
          %v1073 = vpop.f32.mrf.mxu0
          %v1074 = vadd.f32 0.0, %v1073
          %1075 = vmatmul.f32.gmra.mxu0 %v270
          %v1076 = vpop.f32.mrf.mxu0
          %v1077 = vadd.f32 0.0, %v1076
          %1078 = vmatmul.f32.gmra.mxu0 %v273
          %v1079 = vpop.f32.mrf.mxu0
          %v1080 = vadd.f32 0.0, %v1079
          %1081 = vmatmul.f32.gmra.mxu0 %v276
          %v1082 = vpop.f32.mrf.mxu0
          %v1083 = vadd.f32 0.0, %v1082
          %1084 = vmatmul.f32.gmra.mxu0 %v279
          %v1085 = vpop.f32.mrf.mxu0
          %v1086 = vadd.f32 0.0, %v1085
          %1087 = vmatmul.f32.gmra.mxu0 %v282
          %v1088 = vpop.f32.mrf.mxu0
          %v1089 = vadd.f32 0.0, %v1088
          %1090 = vmatmul.f32.gmra.mxu0 %v285
          %v1091 = vpop.f32.mrf.mxu0
          %v1092 = vadd.f32 0.0, %v1091
          %1093 = vmatmul.f32.gmra.mxu0 %v288
          %v1094 = vpop.f32.mrf.mxu0
          %v1095 = vadd.f32 0.0, %v1094
          %1096 = vmatmul.f32.gmra.mxu0 %v291
          %v1097 = vpop.f32.mrf.mxu0
          %v1098 = vadd.f32 0.0, %v1097
          %1099 = vmatmul.f32.gmra.mxu0 %v294
          %v1100 = vpop.f32.mrf.mxu0
          %v1101 = vadd.f32 0.0, %v1100
          %1102 = vmatmul.f32.gmra.mxu0 %v297
          %v1103 = vpop.f32.mrf.mxu0
          %v1104 = vadd.f32 0.0, %v1103
          %1105 = vmatmul.f32.gmra.mxu0 %v300
          %v1106 = vpop.f32.mrf.mxu0
          %v1107 = vadd.f32 0.0, %v1106
          %1108 = vmatmul.f32.gmra.mxu0 %v303
          %v1109 = vpop.f32.mrf.mxu0
          %v1110 = vadd.f32 0.0, %v1109
          %1111 = vmatmul.f32.gmra.mxu0 %v306
          %v1112 = vpop.f32.mrf.mxu0
          %v1113 = vadd.f32 0.0, %v1112
          %1114 = vmatmul.f32.gmra.mxu0 %v309
          %v1115 = vpop.f32.mrf.mxu0
          %v1116 = vadd.f32 0.0, %v1115
          %1117 = vmatmul.f32.gmra.mxu0 %v312
          %v1118 = vpop.f32.mrf.mxu0
          %v1119 = vadd.f32 0.0, %v1118
          %1120 = vmatmul.f32.gmra.mxu0 %v315
          %v1121 = vpop.f32.mrf.mxu0
          %v1122 = vadd.f32 0.0, %v1121
          %1123 = vmatmul.f32.gmra.mxu0 %v318
          %v1124 = vpop.f32.mrf.mxu0
          %v1125 = vadd.f32 0.0, %v1124
          %1126 = vmatmul.f32.gmra.mxu0 %v321
          %v1127 = vpop.f32.mrf.mxu0
          %v1128 = vadd.f32 0.0, %v1127
          %1129 = vmatmul.f32.gmra.mxu0 %v324
          %v1130 = vpop.f32.mrf.mxu0
          %v1131 = vadd.f32 0.0, %v1130
          %1132 = vmatmul.f32.gmra.mxu0 %v327
          %v1133 = vpop.f32.mrf.mxu0
          %v1134 = vadd.f32 0.0, %v1133
          %1135 = vmatmul.f32.gmra.mxu0 %v330
          %v1136 = vpop.f32.mrf.mxu0
          %v1137 = vadd.f32 0.0, %v1136
          %1138 = vmatmul.f32.gmra.mxu0 %v333
          %v1139 = vpop.f32.mrf.mxu0
          %v1140 = vadd.f32 0.0, %v1139
          %1141 = vmatmul.f32.gmra.mxu0 %v336
          %v1142 = vpop.f32.mrf.mxu0
          %v1143 = vadd.f32 0.0, %v1142
          %1144 = vmatmul.f32.gmra.mxu0 %v339
          %v1145 = vpop.f32.mrf.mxu0
          %v1146 = vadd.f32 0.0, %v1145
          %1147 = vmatmul.f32.gmra.mxu0 %v342
          %v1148 = vpop.f32.mrf.mxu0
          %v1149 = vadd.f32 0.0, %v1148
          %1150 = vdwg.mxu0
          %v1151 = vpack.c.bf16 %v1056, %v1056
          %v1152 = vpack.c.bf16 %v1059, %v1059
          %v1153 = vpack.c.bf16 %v1062, %v1062
          %v1154 = vpack.c.bf16 %v1065, %v1065
          %v1155 = vpack.c.bf16 %v1068, %v1068
          %v1156 = vpack.c.bf16 %v1071, %v1071
          %v1157 = vpack.c.bf16 %v1074, %v1074
          %v1158 = vpack.c.bf16 %v1077, %v1077
          %v1159 = vpack.c.bf16 %v1080, %v1080
          %v1160 = vpack.c.bf16 %v1083, %v1083
          %v1161 = vpack.c.bf16 %v1086, %v1086
          %v1162 = vpack.c.bf16 %v1089, %v1089
          %v1163 = vpack.c.bf16 %v1092, %v1092
          %v1164 = vpack.c.bf16 %v1095, %v1095
          %v1165 = vpack.c.bf16 %v1098, %v1098
          %v1166 = vpack.c.bf16 %v1101, %v1101
          %v1167 = vpack.c.bf16 %v1104, %v1104
          %v1168 = vpack.c.bf16 %v1107, %v1107
          %v1169 = vpack.c.bf16 %v1110, %v1110
          %v1170 = vpack.c.bf16 %v1113, %v1113
          %v1171 = vpack.c.bf16 %v1116, %v1116
          %v1172 = vpack.c.bf16 %v1119, %v1119
          %v1173 = vpack.c.bf16 %v1122, %v1122
          %v1174 = vpack.c.bf16 %v1125, %v1125
          %v1175 = vpack.c.bf16 %v1128, %v1128
          %v1176 = vpack.c.bf16 %v1131, %v1131
          %v1177 = vpack.c.bf16 %v1134, %v1134
          %v1178 = vpack.c.bf16 %v1137, %v1137
          %v1179 = vpack.c.bf16 %v1140, %v1140
          %v1180 = vpack.c.bf16 %v1143, %v1143
          %v1181 = vpack.c.bf16 %v1146, %v1146
          %v1182 = vpack.c.bf16 %v1149, %v1149
          %1183 = vst [vmem:[#allocation2 + $0x180] sm:$0xf] %v1151
          %1184 = vst [vmem:[#allocation2 + $0x184] sm:$0xf] %v1152
          %1185 = vst [vmem:[#allocation2 + $0x188] sm:$0xf] %v1153
          %1186 = vst [vmem:[#allocation2 + $0x18c] sm:$0xf] %v1154
          %1187 = vst [vmem:[#allocation2 + $0x190] sm:$0xf] %v1155
          %1188 = vst [vmem:[#allocation2 + $0x194] sm:$0xf] %v1156
          %1189 = vst [vmem:[#allocation2 + $0x198] sm:$0xf] %v1157
          %1190 = vst [vmem:[#allocation2 + $0x19c] sm:$0xf] %v1158
          %1191 = vst [vmem:[#allocation2 + $0x1a0] sm:$0xf] %v1159
          %1192 = vst [vmem:[#allocation2 + $0x1a4] sm:$0xf] %v1160
          %1193 = vst [vmem:[#allocation2 + $0x1a8] sm:$0xf] %v1161
          %1194 = vst [vmem:[#allocation2 + $0x1ac] sm:$0xf] %v1162
          %1195 = vst [vmem:[#allocation2 + $0x1b0] sm:$0xf] %v1163
          %1196 = vst [vmem:[#allocation2 + $0x1b4] sm:$0xf] %v1164
          %1197 = vst [vmem:[#allocation2 + $0x1b8] sm:$0xf] %v1165
          %1198 = vst [vmem:[#allocation2 + $0x1bc] sm:$0xf] %v1166
          %1199 = vst [vmem:[#allocation2 + $0x1c0] sm:$0xf] %v1167
          %1200 = vst [vmem:[#allocation2 + $0x1c4] sm:$0xf] %v1168
          %1201 = vst [vmem:[#allocation2 + $0x1c8] sm:$0xf] %v1169
          %1202 = vst [vmem:[#allocation2 + $0x1cc] sm:$0xf] %v1170
          %1203 = vst [vmem:[#allocation2 + $0x1d0] sm:$0xf] %v1171
          %1204 = vst [vmem:[#allocation2 + $0x1d4] sm:$0xf] %v1172
          %1205 = vst [vmem:[#allocation2 + $0x1d8] sm:$0xf] %v1173
          %1206 = vst [vmem:[#allocation2 + $0x1dc] sm:$0xf] %v1174
          %1207 = vst [vmem:[#allocation2 + $0x1e0] sm:$0xf] %v1175
          %1208 = vst [vmem:[#allocation2 + $0x1e4] sm:$0xf] %v1176
          %1209 = vst [vmem:[#allocation2 + $0x1e8] sm:$0xf] %v1177
          %1210 = vst [vmem:[#allocation2 + $0x1ec] sm:$0xf] %v1178
          %1211 = vst [vmem:[#allocation2 + $0x1f0] sm:$0xf] %v1179
          %1212 = vst [vmem:[#allocation2 + $0x1f4] sm:$0xf] %v1180
          %1213 = vst [vmem:[#allocation2 + $0x1f8] sm:$0xf] %v1181
          %1214 = vst [vmem:[#allocation2 + $0x1fc] sm:$0xf] %v1182
          %v1215 = vld [vmem:[%s3 + $0x6] sm:$0x1]
          %1216 = vmatpush.xpose.msra.mxu0 %v1101
          %1217 = vmatpush.xpose.msra.mxu0 %v1098
          %1218 = vmatpush.xpose.msra.mxu0 %v1095
          %1219 = vmatpush.xpose.msra.mxu0 %v1092
          %1220 = vmatpush.xpose.msra.mxu0 %v1089
          %1221 = vmatpush.xpose.msra.mxu0 %v1086
          %1222 = vmatpush.xpose.msra.mxu0 %v1083
          %1223 = vmatpush.xpose.msra.mxu0 %v1080
          %1224 = vmatpush.xpose.msra.mxu0 %v1077
          %1225 = vmatpush.xpose.msra.mxu0 %v1074
          %1226 = vmatpush.xpose.msra.mxu0 %v1071
          %1227 = vmatpush.xpose.msra.mxu0 %v1068
          %1228 = vmatpush.xpose.msra.mxu0 %v1065
          %1229 = vmatpush.xpose.msra.mxu0 %v1062
          %1230 = vmatpush.xpose.msra.mxu0 %v1059
          %1231 = vmatpush.xpose.msra.mxu0 %v1056
          %1232 = vmatmul.f32.gmra.mxu0 %v1215
          %v1233 = vpop.f32.mrf.mxu0
          %v1234 = vadd.f32 0.0, %v1233
          %1235 = vdwg.mxu0
          %1236 = vmatpush.xpose.msra.mxu0 %v1149
          %1237 = vmatpush.xpose.msra.mxu0 %v1146
          %1238 = vmatpush.xpose.msra.mxu0 %v1143
          %1239 = vmatpush.xpose.msra.mxu0 %v1140
          %1240 = vmatpush.xpose.msra.mxu0 %v1137
          %1241 = vmatpush.xpose.msra.mxu0 %v1134
          %1242 = vmatpush.xpose.msra.mxu0 %v1131
          %1243 = vmatpush.xpose.msra.mxu0 %v1128
          %1244 = vmatpush.xpose.msra.mxu0 %v1125
          %1245 = vmatpush.xpose.msra.mxu0 %v1122
          %1246 = vmatpush.xpose.msra.mxu0 %v1119
          %1247 = vmatpush.xpose.msra.mxu0 %v1116
          %1248 = vmatpush.xpose.msra.mxu0 %v1113
          %1249 = vmatpush.xpose.msra.mxu0 %v1110
          %1250 = vmatpush.xpose.msra.mxu0 %v1107
          %1251 = vmatpush.xpose.msra.mxu0 %v1104
          %1252 = vmatmul.f32.gmra.mxu0 %v1215
          %v1253 = vpop.f32.mrf.mxu0
          %v1254 = vadd.f32 0.0, %v1253
          %1255 = vdwg.mxu0
          %v1258 = vrot.slane %v1254, 7
          %v1259 = vsel %vm565, %v1234, %v1258
          %s1261 = scalar_lea.vmem [#allocation3], 3
          %1262 = vst.msk [vmem:[%s1261] ss:$4 sm:$0x3] %vm571, %v1259
        $region40: #{tpu_custom_call.1} parent=35 // pred_fallthru
          _
        %s1263 = smul.u32 %s21, 256
        %s1264 = sshra.s32 %s1263, 3
        %s1265 = sand.u32 %s1263, 7
        %s1266 = smul.addr %s1264, 4
        %s1267 = scalar_lea.vmem [#allocation2], %s1266
        %v1268 = vld [vmem:[%s1267] sm:$0xf]
        %v1269 = vld [vmem:[%s1267 + $0x4] sm:$0xf]
        %v1270 = vld [vmem:[%s1267 + $0x8] sm:$0xf]
        %v1271 = vld [vmem:[%s1267 + $0xc] sm:$0xf]
        %v1272 = vld [vmem:[%s1267 + $0x10] sm:$0xf]
        %v1273 = vld [vmem:[%s1267 + $0x14] sm:$0xf]
        %v1274 = vld [vmem:[%s1267 + $0x18] sm:$0xf]
        %v1275 = vld [vmem:[%s1267 + $0x1c] sm:$0xf]
        %v1276 = vld [vmem:[%s1267 + $0x20] sm:$0xf]
        %v1277 = vld [vmem:[%s1267 + $0x24] sm:$0xf]
        %v1278 = vld [vmem:[%s1267 + $0x28] sm:$0xf]
        %v1279 = vld [vmem:[%s1267 + $0x2c] sm:$0xf]
        %v1280 = vld [vmem:[%s1267 + $0x30] sm:$0xf]
        %v1281 = vld [vmem:[%s1267 + $0x34] sm:$0xf]
        %v1282 = vld [vmem:[%s1267 + $0x38] sm:$0xf]
        %v1283 = vld [vmem:[%s1267 + $0x3c] sm:$0xf]
        %v1284 = vld [vmem:[%s1267 + $0x40] sm:$0xf]
        %v1285 = vld [vmem:[%s1267 + $0x44] sm:$0xf]
        %v1286 = vld [vmem:[%s1267 + $0x48] sm:$0xf]
        %v1287 = vld [vmem:[%s1267 + $0x4c] sm:$0xf]
        %v1288 = vld [vmem:[%s1267 + $0x50] sm:$0xf]
        %v1289 = vld [vmem:[%s1267 + $0x54] sm:$0xf]
        %v1290 = vld [vmem:[%s1267 + $0x58] sm:$0xf]
        %v1291 = vld [vmem:[%s1267 + $0x5c] sm:$0xf]
        %v1292 = vld [vmem:[%s1267 + $0x60] sm:$0xf]
        %v1293 = vld [vmem:[%s1267 + $0x64] sm:$0xf]
        %v1294 = vld [vmem:[%s1267 + $0x68] sm:$0xf]
        %v1295 = vld [vmem:[%s1267 + $0x6c] sm:$0xf]
        %v1296 = vld [vmem:[%s1267 + $0x70] sm:$0xf]
        %v1297 = vld [vmem:[%s1267 + $0x74] sm:$0xf]
        %v1298 = vld [vmem:[%s1267 + $0x78] sm:$0xf]
        %v1299 = vld [vmem:[%s1267 + $0x7c] sm:$0xf]
        %s1300 = smul.u32 %s20, 128
        %s1301 = sadd.s32 %s1263, %s1300
        %s1302 = sshra.s32 %s1301, 3
        %s1303 = sand.u32 %s1301, 7
        %s1304 = smul.addr %s1302, 4
        %s1305 = scalar_lea.vmem [#allocation2], %s1304
        %v1306 = vld [vmem:[%s1305] sm:$0xf]
        %v1307 = vld [vmem:[%s1305 + $0x4] sm:$0xf]
        %v1308 = vld [vmem:[%s1305 + $0x8] sm:$0xf]
        %v1309 = vld [vmem:[%s1305 + $0xc] sm:$0xf]
        %v1310 = vld [vmem:[%s1305 + $0x10] sm:$0xf]
        %v1311 = vld [vmem:[%s1305 + $0x14] sm:$0xf]
        %v1312 = vld [vmem:[%s1305 + $0x18] sm:$0xf]
        %v1313 = vld [vmem:[%s1305 + $0x1c] sm:$0xf]
        %v1314 = vld [vmem:[%s1305 + $0x20] sm:$0xf]
        %v1315 = vld [vmem:[%s1305 + $0x24] sm:$0xf]
        %v1316 = vld [vmem:[%s1305 + $0x28] sm:$0xf]
        %v1317 = vld [vmem:[%s1305 + $0x2c] sm:$0xf]
        %v1318 = vld [vmem:[%s1305 + $0x30] sm:$0xf]
        %v1319 = vld [vmem:[%s1305 + $0x34] sm:$0xf]
        %v1320 = vld [vmem:[%s1305 + $0x38] sm:$0xf]
        %v1321 = vld [vmem:[%s1305 + $0x3c] sm:$0xf]
        %s1322 = smul.u32 %s21, 2
        %s1323 = sadd.s32 %s1322, 1
        %s1324 = scalar_lea.vmem %s3, %s1323
        %v1325 = vld [vmem:[%s1324] sm:$0x1]
        %s1326 = sshra.s32 %s21, 2
        %s1327 = sand.u32 %s21, 3
        %s1328 = sshra.s32 %s21, 2
        %s1329 = sand.u32 %s21, 3
        %s1330 = smul.u32 %s1326, 2
        %s1331 = smul.u32 %s1330, 4
        %s1332 = sadd.s32 %s1331, %s1329
        %s1333 = scalar_lea.vmem [#allocation3], %s1332
        %v1334 = vld [vmem:[%s1333] ss:$4 sm:$0x3]
        %v1335 = vunpack.c.l.bf16 %v1306
        %v1336 = vunpack.c.l.bf16 %v1307
        %v1337 = vunpack.c.l.bf16 %v1308
        %v1338 = vunpack.c.l.bf16 %v1309
        %v1339 = vunpack.c.l.bf16 %v1310
        %v1340 = vunpack.c.l.bf16 %v1311
        %v1341 = vunpack.c.l.bf16 %v1312
        %v1342 = vunpack.c.l.bf16 %v1313
        %v1343 = vunpack.c.l.bf16 %v1314
        %v1344 = vunpack.c.l.bf16 %v1315
        %v1345 = vunpack.c.l.bf16 %v1316
        %v1346 = vunpack.c.l.bf16 %v1317
        %v1347 = vunpack.c.l.bf16 %v1318
        %v1348 = vunpack.c.l.bf16 %v1319
        %v1349 = vunpack.c.l.bf16 %v1320
        %v1350 = vunpack.c.l.bf16 %v1321
        %v1351 = vperm.slane %v1325, 0
        %v1352 = vmul.f32 %v1335, %v1351
        %v1353 = vmul.f32 %v1336, %v1351
        %v1354 = vmul.f32 %v1337, %v1351
        %v1355 = vmul.f32 %v1338, %v1351
        %v1356 = vmul.f32 %v1339, %v1351
        %v1357 = vmul.f32 %v1340, %v1351
        %v1358 = vmul.f32 %v1341, %v1351
        %v1359 = vmul.f32 %v1342, %v1351
        %v1360 = vmul.f32 %v1343, %v1351
        %v1361 = vmul.f32 %v1344, %v1351
        %v1362 = vmul.f32 %v1345, %v1351
        %v1363 = vmul.f32 %v1346, %v1351
        %v1364 = vmul.f32 %v1347, %v1351
        %v1365 = vmul.f32 %v1348, %v1351
        %v1366 = vmul.f32 %v1349, %v1351
        %v1367 = vmul.f32 %v1350, %v1351
        %1368 = vadd.xlane.f32.xlu0 %v1352
        %v1369 = vpop.xlane.xlu0 %1368
        %1370 = vadd.xlane.f32.xlu0 %v1353
        %v1371 = vpop.xlane.xlu0 %1370
        %1372 = vadd.xlane.f32.xlu0 %v1354
        %v1373 = vpop.xlane.xlu0 %1372
        %1374 = vadd.xlane.f32.xlu0 %v1355
        %v1375 = vpop.xlane.xlu0 %1374
        %1376 = vadd.xlane.f32.xlu0 %v1356
        %v1377 = vpop.xlane.xlu0 %1376
        %1378 = vadd.xlane.f32.xlu0 %v1357
        %v1379 = vpop.xlane.xlu0 %1378
        %1380 = vadd.xlane.f32.xlu0 %v1358
        %v1381 = vpop.xlane.xlu0 %1380
        %1382 = vadd.xlane.f32.xlu0 %v1359
        %v1383 = vpop.xlane.xlu0 %1382
        %1384 = vadd.xlane.f32.xlu0 %v1360
        %v1385 = vpop.xlane.xlu0 %1384
        %1386 = vadd.xlane.f32.xlu0 %v1361
        %v1387 = vpop.xlane.xlu0 %1386
        %1388 = vadd.xlane.f32.xlu0 %v1362
        %v1389 = vpop.xlane.xlu0 %1388
        %1390 = vadd.xlane.f32.xlu0 %v1363
        %v1391 = vpop.xlane.xlu0 %1390
        %1392 = vadd.xlane.f32.xlu0 %v1364
        %v1393 = vpop.xlane.xlu0 %1392
        %1394 = vadd.xlane.f32.xlu0 %v1365
        %v1395 = vpop.xlane.xlu0 %1394
        %1396 = vadd.xlane.f32.xlu0 %v1366
        %v1397 = vpop.xlane.xlu0 %1396
        %1398 = vadd.xlane.f32.xlu0 %v1367
        %v1399 = vpop.xlane.xlu0 %1398
        %v1401 = vperm.slane %v1334, 0
        %v1402 = vperm.slane %v1334, 1
        %v1405 = vadd.f32 %v1369, %v1401
        %v1406 = vadd.f32 %v1369, %v1402
        %v1407 = vadd.f32 %v1371, %v1401
        %v1408 = vadd.f32 %v1371, %v1402
        %v1409 = vadd.f32 %v1373, %v1401
        %v1410 = vadd.f32 %v1373, %v1402
        %v1411 = vadd.f32 %v1375, %v1401
        %v1412 = vadd.f32 %v1375, %v1402
        %v1413 = vadd.f32 %v1377, %v1401
        %v1414 = vadd.f32 %v1377, %v1402
        %v1415 = vadd.f32 %v1379, %v1401
        %v1416 = vadd.f32 %v1379, %v1402
        %v1417 = vadd.f32 %v1381, %v1401
        %v1418 = vadd.f32 %v1381, %v1402
        %v1419 = vadd.f32 %v1383, %v1401
        %v1420 = vadd.f32 %v1383, %v1402
        %v1421 = vadd.f32 %v1385, %v1401
        %v1422 = vadd.f32 %v1385, %v1402
        %v1423 = vadd.f32 %v1387, %v1401
        %v1424 = vadd.f32 %v1387, %v1402
        %v1425 = vadd.f32 %v1389, %v1401
        %v1426 = vadd.f32 %v1389, %v1402
        %v1427 = vadd.f32 %v1391, %v1401
        %v1428 = vadd.f32 %v1391, %v1402
        %v1429 = vadd.f32 %v1393, %v1401
        %v1430 = vadd.f32 %v1393, %v1402
        %v1431 = vadd.f32 %v1395, %v1401
        %v1432 = vadd.f32 %v1395, %v1402
        %v1433 = vadd.f32 %v1397, %v1401
        %v1434 = vadd.f32 %v1397, %v1402
        %v1435 = vadd.f32 %v1399, %v1401
        %v1436 = vadd.f32 %v1399, %v1402
        %v1437 = vmul.f32 %v1405, 0.01
        %v1438 = vmul.f32 %v1406, 0.01
        %v1439 = vmul.f32 %v1407, 0.01
        %v1440 = vmul.f32 %v1408, 0.01
        %v1441 = vmul.f32 %v1409, 0.01
        %v1442 = vmul.f32 %v1410, 0.01
        %v1443 = vmul.f32 %v1411, 0.01
        %v1444 = vmul.f32 %v1412, 0.01
        %v1445 = vmul.f32 %v1413, 0.01
        %v1446 = vmul.f32 %v1414, 0.01
        %v1447 = vmul.f32 %v1415, 0.01
        %v1448 = vmul.f32 %v1416, 0.01
        %v1449 = vmul.f32 %v1417, 0.01
        %v1450 = vmul.f32 %v1418, 0.01
        %v1451 = vmul.f32 %v1419, 0.01
        %v1452 = vmul.f32 %v1420, 0.01
        %v1453 = vmul.f32 %v1421, 0.01
        %v1454 = vmul.f32 %v1422, 0.01
        %v1455 = vmul.f32 %v1423, 0.01
        %v1456 = vmul.f32 %v1424, 0.01
        %v1457 = vmul.f32 %v1425, 0.01
        %v1458 = vmul.f32 %v1426, 0.01
        %v1459 = vmul.f32 %v1427, 0.01
        %v1460 = vmul.f32 %v1428, 0.01
        %v1461 = vmul.f32 %v1429, 0.01
        %v1462 = vmul.f32 %v1430, 0.01
        %v1463 = vmul.f32 %v1431, 0.01
        %v1464 = vmul.f32 %v1432, 0.01
        %v1465 = vmul.f32 %v1433, 0.01
        %v1466 = vmul.f32 %v1434, 0.01
        %v1467 = vmul.f32 %v1435, 0.01
        %v1468 = vmul.f32 %v1436, 0.01
        %v1469 = vmax.f32 %v1405, %v1437
        %v1470 = vmax.f32 %v1406, %v1438
        %v1471 = vmax.f32 %v1407, %v1439
        %v1472 = vmax.f32 %v1408, %v1440
        %v1473 = vmax.f32 %v1409, %v1441
        %v1474 = vmax.f32 %v1410, %v1442
        %v1475 = vmax.f32 %v1411, %v1443
        %v1476 = vmax.f32 %v1412, %v1444
        %v1477 = vmax.f32 %v1413, %v1445
        %v1478 = vmax.f32 %v1414, %v1446
        %v1479 = vmax.f32 %v1415, %v1447
        %v1480 = vmax.f32 %v1416, %v1448
        %v1481 = vmax.f32 %v1417, %v1449
        %v1482 = vmax.f32 %v1418, %v1450
        %v1483 = vmax.f32 %v1419, %v1451
        %v1484 = vmax.f32 %v1420, %v1452
        %v1485 = vmax.f32 %v1421, %v1453
        %v1486 = vmax.f32 %v1422, %v1454
        %v1487 = vmax.f32 %v1423, %v1455
        %v1488 = vmax.f32 %v1424, %v1456
        %v1489 = vmax.f32 %v1425, %v1457
        %v1490 = vmax.f32 %v1426, %v1458
        %v1491 = vmax.f32 %v1427, %v1459
        %v1492 = vmax.f32 %v1428, %v1460
        %v1493 = vmax.f32 %v1429, %v1461
        %v1494 = vmax.f32 %v1430, %v1462
        %v1495 = vmax.f32 %v1431, %v1463
        %v1496 = vmax.f32 %v1432, %v1464
        %v1497 = vmax.f32 %v1433, %v1465
        %v1498 = vmax.f32 %v1434, %v1466
        %v1499 = vmax.f32 %v1435, %v1467
        %v1500 = vmax.f32 %v1436, %v1468
        %v1501 = vld [vmem:[%s199] sm:$0xff]
        %v1502 = vld [vmem:[%s199 + $0x8] sm:$0xff]
        %v1503 = vld [vmem:[%s199 + $0x10] sm:$0xff]
        %v1504 = vld [vmem:[%s199 + $0x18] sm:$0xff]
        %v1505 = vld [vmem:[%s199 + $0x20] sm:$0xff]
        %v1506 = vld [vmem:[%s199 + $0x28] sm:$0xff]
        %v1507 = vld [vmem:[%s199 + $0x30] sm:$0xff]
        %v1508 = vld [vmem:[%s199 + $0x38] sm:$0xff]
        %vm1509 = vnez %v1501
        %vm1510 = vnez %v1502
        %vm1511 = vnez %v1503
        %vm1512 = vnez %v1504
        %vm1513 = vnez %v1505
        %vm1514 = vnez %v1506
        %vm1515 = vnez %v1507
        %vm1516 = vnez %v1508
        %v1517 = vsel %vm1509, 16843009, 0
        %v1518 = vsel %vm1510, 16843009, 0
        %v1519 = vsel %vm1511, 16843009, 0
        %v1520 = vsel %vm1512, 16843009, 0
        %v1521 = vsel %vm1513, 16843009, 0
        %v1522 = vsel %vm1514, 16843009, 0
        %v1523 = vsel %vm1515, 16843009, 0
        %v1524 = vsel %vm1516, 16843009, 0
        %v1525 = vunpack.c.0.s8 %v1517
        %v1526 = vunpack.c.0.s8 %v1518
        %v1527 = vunpack.c.1.s8 %v1517
        %v1528 = vunpack.c.1.s8 %v1518
        %v1529 = vunpack.c.2.s8 %v1517
        %v1530 = vunpack.c.2.s8 %v1518
        %v1531 = vunpack.c.3.s8 %v1517
        %v1532 = vunpack.c.3.s8 %v1518
        %v1533 = vunpack.c.0.s8 %v1519
        %v1534 = vunpack.c.0.s8 %v1520
        %v1535 = vunpack.c.1.s8 %v1519
        %v1536 = vunpack.c.1.s8 %v1520
        %v1537 = vunpack.c.2.s8 %v1519
        %v1538 = vunpack.c.2.s8 %v1520
        %v1539 = vunpack.c.3.s8 %v1519
        %v1540 = vunpack.c.3.s8 %v1520
        %v1541 = vunpack.c.0.s8 %v1521
        %v1542 = vunpack.c.0.s8 %v1522
        %v1543 = vunpack.c.1.s8 %v1521
        %v1544 = vunpack.c.1.s8 %v1522
        %v1545 = vunpack.c.2.s8 %v1521
        %v1546 = vunpack.c.2.s8 %v1522
        %v1547 = vunpack.c.3.s8 %v1521
        %v1548 = vunpack.c.3.s8 %v1522
        %v1549 = vunpack.c.0.s8 %v1523
        %v1550 = vunpack.c.0.s8 %v1524
        %v1551 = vunpack.c.1.s8 %v1523
        %v1552 = vunpack.c.1.s8 %v1524
        %v1553 = vunpack.c.2.s8 %v1523
        %v1554 = vunpack.c.2.s8 %v1524
        %v1555 = vunpack.c.3.s8 %v1523
        %v1556 = vunpack.c.3.s8 %v1524
        %v1557 = vpack.c.b16 %v1526, %v1525
        %v1558 = vpack.c.b8 %v1557, %v1557
        %v1559 = vpack.c.b16 %v1528, %v1527
        %v1560 = vpack.c.b8 %v1559, %v1559
        %v1561 = vpack.c.b16 %v1530, %v1529
        %v1562 = vpack.c.b8 %v1561, %v1561
        %v1563 = vpack.c.b16 %v1532, %v1531
        %v1564 = vpack.c.b8 %v1563, %v1563
        %v1565 = vpack.c.b16 %v1534, %v1533
        %v1566 = vpack.c.b8 %v1565, %v1565
        %v1567 = vpack.c.b16 %v1536, %v1535
        %v1568 = vpack.c.b8 %v1567, %v1567
        %v1569 = vpack.c.b16 %v1538, %v1537
        %v1570 = vpack.c.b8 %v1569, %v1569
        %v1571 = vpack.c.b16 %v1540, %v1539
        %v1572 = vpack.c.b8 %v1571, %v1571
        %v1573 = vpack.c.b16 %v1542, %v1541
        %v1574 = vpack.c.b8 %v1573, %v1573
        %v1575 = vpack.c.b16 %v1544, %v1543
        %v1576 = vpack.c.b8 %v1575, %v1575
        %v1577 = vpack.c.b16 %v1546, %v1545
        %v1578 = vpack.c.b8 %v1577, %v1577
        %v1579 = vpack.c.b16 %v1548, %v1547
        %v1580 = vpack.c.b8 %v1579, %v1579
        %v1581 = vpack.c.b16 %v1550, %v1549
        %v1582 = vpack.c.b8 %v1581, %v1581
        %v1583 = vpack.c.b16 %v1552, %v1551
        %v1584 = vpack.c.b8 %v1583, %v1583
        %v1585 = vpack.c.b16 %v1554, %v1553
        %v1586 = vpack.c.b8 %v1585, %v1585
        %v1587 = vpack.c.b16 %v1556, %v1555
        %v1588 = vpack.c.b8 %v1587, %v1587
        %vm1589 = vnez %v1558
        %vm1590 = vnez %v1560
        %vm1591 = vnez %v1562
        %vm1592 = vnez %v1564
        %vm1593 = vnez %v1566
        %vm1594 = vnez %v1568
        %vm1595 = vnez %v1570
        %vm1596 = vnez %v1572
        %vm1597 = vnez %v1574
        %vm1598 = vnez %v1576
        %vm1599 = vnez %v1578
        %vm1600 = vnez %v1580
        %vm1601 = vnez %v1582
        %vm1602 = vnez %v1584
        %vm1603 = vnez %v1586
        %vm1604 = vnez %v1588
        %v1605 = vsel %vm1589, 16843009, 0
        %v1606 = vsel %vm1590, 16843009, 0
        %v1607 = vsel %vm1591, 16843009, 0
        %v1608 = vsel %vm1592, 16843009, 0
        %v1609 = vsel %vm1593, 16843009, 0
        %v1610 = vsel %vm1594, 16843009, 0
        %v1611 = vsel %vm1595, 16843009, 0
        %v1612 = vsel %vm1596, 16843009, 0
        %v1613 = vsel %vm1597, 16843009, 0
        %v1614 = vsel %vm1598, 16843009, 0
        %v1615 = vsel %vm1599, 16843009, 0
        %v1616 = vsel %vm1600, 16843009, 0
        %v1617 = vsel %vm1601, 16843009, 0
        %v1618 = vsel %vm1602, 16843009, 0
        %v1619 = vsel %vm1603, 16843009, 0
        %v1620 = vsel %vm1604, 16843009, 0
        %v1621 = vunpack.c.0.s8 %v1605
        %v1622 = vunpack.c.1.s8 %v1605
        %v1623 = vunpack.c.0.s8 %v1606
        %v1624 = vunpack.c.1.s8 %v1606
        %v1625 = vunpack.c.0.s8 %v1607
        %v1626 = vunpack.c.1.s8 %v1607
        %v1627 = vunpack.c.0.s8 %v1608
        %v1628 = vunpack.c.1.s8 %v1608
        %v1629 = vunpack.c.0.s8 %v1609
        %v1630 = vunpack.c.1.s8 %v1609
        %v1631 = vunpack.c.0.s8 %v1610
        %v1632 = vunpack.c.1.s8 %v1610
        %v1633 = vunpack.c.0.s8 %v1611
        %v1634 = vunpack.c.1.s8 %v1611
        %v1635 = vunpack.c.0.s8 %v1612
        %v1636 = vunpack.c.1.s8 %v1612
        %v1637 = vunpack.c.0.s8 %v1613
        %v1638 = vunpack.c.1.s8 %v1613
        %v1639 = vunpack.c.0.s8 %v1614
        %v1640 = vunpack.c.1.s8 %v1614
        %v1641 = vunpack.c.0.s8 %v1615
        %v1642 = vunpack.c.1.s8 %v1615
        %v1643 = vunpack.c.0.s8 %v1616
        %v1644 = vunpack.c.1.s8 %v1616
        %v1645 = vunpack.c.0.s8 %v1617
        %v1646 = vunpack.c.1.s8 %v1617
        %v1647 = vunpack.c.0.s8 %v1618
        %v1648 = vunpack.c.1.s8 %v1618
        %v1649 = vunpack.c.0.s8 %v1619
        %v1650 = vunpack.c.1.s8 %v1619
        %v1651 = vunpack.c.0.s8 %v1620
        %v1652 = vunpack.c.1.s8 %v1620
        %vm1653 = vcmp.ne.s32.totalorder %v1621, 0
        %vm1654 = vcmp.ne.s32.totalorder %v1622, 0
        %vm1655 = vcmp.ne.s32.totalorder %v1623, 0
        %vm1656 = vcmp.ne.s32.totalorder %v1624, 0
        %vm1657 = vcmp.ne.s32.totalorder %v1625, 0
        %vm1658 = vcmp.ne.s32.totalorder %v1626, 0
        %vm1659 = vcmp.ne.s32.totalorder %v1627, 0
        %vm1660 = vcmp.ne.s32.totalorder %v1628, 0
        %vm1661 = vcmp.ne.s32.totalorder %v1629, 0
        %vm1662 = vcmp.ne.s32.totalorder %v1630, 0
        %vm1663 = vcmp.ne.s32.totalorder %v1631, 0
        %vm1664 = vcmp.ne.s32.totalorder %v1632, 0
        %vm1665 = vcmp.ne.s32.totalorder %v1633, 0
        %vm1666 = vcmp.ne.s32.totalorder %v1634, 0
        %vm1667 = vcmp.ne.s32.totalorder %v1635, 0
        %vm1668 = vcmp.ne.s32.totalorder %v1636, 0
        %vm1669 = vcmp.ne.s32.totalorder %v1637, 0
        %vm1670 = vcmp.ne.s32.totalorder %v1638, 0
        %vm1671 = vcmp.ne.s32.totalorder %v1639, 0
        %vm1672 = vcmp.ne.s32.totalorder %v1640, 0
        %vm1673 = vcmp.ne.s32.totalorder %v1641, 0
        %vm1674 = vcmp.ne.s32.totalorder %v1642, 0
        %vm1675 = vcmp.ne.s32.totalorder %v1643, 0
        %vm1676 = vcmp.ne.s32.totalorder %v1644, 0
        %vm1677 = vcmp.ne.s32.totalorder %v1645, 0
        %vm1678 = vcmp.ne.s32.totalorder %v1646, 0
        %vm1679 = vcmp.ne.s32.totalorder %v1647, 0
        %vm1680 = vcmp.ne.s32.totalorder %v1648, 0
        %vm1681 = vcmp.ne.s32.totalorder %v1649, 0
        %vm1682 = vcmp.ne.s32.totalorder %v1650, 0
        %vm1683 = vcmp.ne.s32.totalorder %v1651, 0
        %vm1684 = vcmp.ne.s32.totalorder %v1652, 0
        %v1685 = vsel %vm1653, %v1469, -1e+30
        %v1686 = vsel %vm1654, %v1470, -1e+30
        %v1687 = vsel %vm1655, %v1471, -1e+30
        %v1688 = vsel %vm1656, %v1472, -1e+30
        %v1689 = vsel %vm1657, %v1473, -1e+30
        %v1690 = vsel %vm1658, %v1474, -1e+30
        %v1691 = vsel %vm1659, %v1475, -1e+30
        %v1692 = vsel %vm1660, %v1476, -1e+30
        %v1693 = vsel %vm1661, %v1477, -1e+30
        %v1694 = vsel %vm1662, %v1478, -1e+30
        %v1695 = vsel %vm1663, %v1479, -1e+30
        %v1696 = vsel %vm1664, %v1480, -1e+30
        %v1697 = vsel %vm1665, %v1481, -1e+30
        %v1698 = vsel %vm1666, %v1482, -1e+30
        %v1699 = vsel %vm1667, %v1483, -1e+30
        %v1700 = vsel %vm1668, %v1484, -1e+30
        %v1701 = vsel %vm1669, %v1485, -1e+30
        %v1702 = vsel %vm1670, %v1486, -1e+30
        %v1703 = vsel %vm1671, %v1487, -1e+30
        %v1704 = vsel %vm1672, %v1488, -1e+30
        %v1705 = vsel %vm1673, %v1489, -1e+30
        %v1706 = vsel %vm1674, %v1490, -1e+30
        %v1707 = vsel %vm1675, %v1491, -1e+30
        %v1708 = vsel %vm1676, %v1492, -1e+30
        %v1709 = vsel %vm1677, %v1493, -1e+30
        %v1710 = vsel %vm1678, %v1494, -1e+30
        %v1711 = vsel %vm1679, %v1495, -1e+30
        %v1712 = vsel %vm1680, %v1496, -1e+30
        %v1713 = vsel %vm1681, %v1497, -1e+30
        %v1714 = vsel %vm1682, %v1498, -1e+30
        %v1715 = vsel %vm1683, %v1499, -1e+30
        %v1716 = vsel %vm1684, %v1500, -1e+30
        %v1717 = vmax.f32 %v1685, %v1686
        %1718 = vmax.xlane.f32.xlu0 %v1717
        %v1719 = vpop.xlane.xlu0 %1718
        %v1720 = vmax.f32 %v1687, %v1688
        %1721 = vmax.xlane.f32.xlu0 %v1720
        %v1722 = vpop.xlane.xlu0 %1721
        %v1723 = vmax.f32 %v1689, %v1690
        %1724 = vmax.xlane.f32.xlu0 %v1723
        %v1725 = vpop.xlane.xlu0 %1724
        %v1726 = vmax.f32 %v1691, %v1692
        %1727 = vmax.xlane.f32.xlu0 %v1726
        %v1728 = vpop.xlane.xlu0 %1727
        %v1729 = vmax.f32 %v1693, %v1694
        %1730 = vmax.xlane.f32.xlu0 %v1729
        %v1731 = vpop.xlane.xlu0 %1730
        %v1732 = vmax.f32 %v1695, %v1696
        %1733 = vmax.xlane.f32.xlu0 %v1732
        %v1734 = vpop.xlane.xlu0 %1733
        %v1735 = vmax.f32 %v1697, %v1698
        %1736 = vmax.xlane.f32.xlu0 %v1735
        %v1737 = vpop.xlane.xlu0 %1736
        %v1738 = vmax.f32 %v1699, %v1700
        %1739 = vmax.xlane.f32.xlu0 %v1738
        %v1740 = vpop.xlane.xlu0 %1739
        %v1741 = vmax.f32 %v1701, %v1702
        %1742 = vmax.xlane.f32.xlu0 %v1741
        %v1743 = vpop.xlane.xlu0 %1742
        %v1744 = vmax.f32 %v1703, %v1704
        %1745 = vmax.xlane.f32.xlu0 %v1744
        %v1746 = vpop.xlane.xlu0 %1745
        %v1747 = vmax.f32 %v1705, %v1706
        %1748 = vmax.xlane.f32.xlu0 %v1747
        %v1749 = vpop.xlane.xlu0 %1748
        %v1750 = vmax.f32 %v1707, %v1708
        %1751 = vmax.xlane.f32.xlu0 %v1750
        %v1752 = vpop.xlane.xlu0 %1751
        %v1753 = vmax.f32 %v1709, %v1710
        %1754 = vmax.xlane.f32.xlu0 %v1753
        %v1755 = vpop.xlane.xlu0 %1754
        %v1756 = vmax.f32 %v1711, %v1712
        %1757 = vmax.xlane.f32.xlu0 %v1756
        %v1758 = vpop.xlane.xlu0 %1757
        %v1759 = vmax.f32 %v1713, %v1714
        %1760 = vmax.xlane.f32.xlu0 %v1759
        %v1761 = vpop.xlane.xlu0 %1760
        %v1762 = vmax.f32 %v1715, %v1716
        %1763 = vmax.xlane.f32.xlu0 %v1762
        %v1764 = vpop.xlane.xlu0 %1763
        %v1765 = vsub.f32 %v1685, %v1719
        %v1766 = vsub.f32 %v1686, %v1719
        %v1767 = vsub.f32 %v1687, %v1722
        %v1768 = vsub.f32 %v1688, %v1722
        %v1769 = vsub.f32 %v1689, %v1725
        %v1770 = vsub.f32 %v1690, %v1725
        %v1771 = vsub.f32 %v1691, %v1728
        %v1772 = vsub.f32 %v1692, %v1728
        %v1773 = vsub.f32 %v1693, %v1731
        %v1774 = vsub.f32 %v1694, %v1731
        %v1775 = vsub.f32 %v1695, %v1734
        %v1776 = vsub.f32 %v1696, %v1734
        %v1777 = vsub.f32 %v1697, %v1737
        %v1778 = vsub.f32 %v1698, %v1737
        %v1779 = vsub.f32 %v1699, %v1740
        %v1780 = vsub.f32 %v1700, %v1740
        %v1781 = vsub.f32 %v1701, %v1743
        %v1782 = vsub.f32 %v1702, %v1743
        %v1783 = vsub.f32 %v1703, %v1746
        %v1784 = vsub.f32 %v1704, %v1746
        %v1785 = vsub.f32 %v1705, %v1749
        %v1786 = vsub.f32 %v1706, %v1749
        %v1787 = vsub.f32 %v1707, %v1752
        %v1788 = vsub.f32 %v1708, %v1752
        %v1789 = vsub.f32 %v1709, %v1755
        %v1790 = vsub.f32 %v1710, %v1755
        %v1791 = vsub.f32 %v1711, %v1758
        %v1792 = vsub.f32 %v1712, %v1758
        %v1793 = vsub.f32 %v1713, %v1761
        %v1794 = vsub.f32 %v1714, %v1761
        %v1795 = vsub.f32 %v1715, %v1764
        %v1796 = vsub.f32 %v1716, %v1764
        %v1797 = vmul.f32 %v1765, 1.442695
        %v1798 = vpow.pop %v1797
        %v1799 = vmul.f32 %v1766, 1.442695
        %v1800 = vpow.pop %v1799
        %v1801 = vmul.f32 %v1767, 1.442695
        %v1802 = vpow.pop %v1801
        %v1803 = vmul.f32 %v1768, 1.442695
        %v1804 = vpow.pop %v1803
        %v1805 = vmul.f32 %v1769, 1.442695
        %v1806 = vpow.pop %v1805
        %v1807 = vmul.f32 %v1770, 1.442695
        %v1808 = vpow.pop %v1807
        %v1809 = vmul.f32 %v1771, 1.442695
        %v1810 = vpow.pop %v1809
        %v1811 = vmul.f32 %v1772, 1.442695
        %v1812 = vpow.pop %v1811
        %v1813 = vmul.f32 %v1773, 1.442695
        %v1814 = vpow.pop %v1813
        %v1815 = vmul.f32 %v1774, 1.442695
        %v1816 = vpow.pop %v1815
        %v1817 = vmul.f32 %v1775, 1.442695
        %v1818 = vpow.pop %v1817
        %v1819 = vmul.f32 %v1776, 1.442695
        %v1820 = vpow.pop %v1819
        %v1821 = vmul.f32 %v1777, 1.442695
        %v1822 = vpow.pop %v1821
        %v1823 = vmul.f32 %v1778, 1.442695
        %v1824 = vpow.pop %v1823
        %v1825 = vmul.f32 %v1779, 1.442695
        %v1826 = vpow.pop %v1825
        %v1827 = vmul.f32 %v1780, 1.442695
        %v1828 = vpow.pop %v1827
        %v1829 = vmul.f32 %v1781, 1.442695
        %v1830 = vpow.pop %v1829
        %v1831 = vmul.f32 %v1782, 1.442695
        %v1832 = vpow.pop %v1831
        %v1833 = vmul.f32 %v1783, 1.442695
        %v1834 = vpow.pop %v1833
        %v1835 = vmul.f32 %v1784, 1.442695
        %v1836 = vpow.pop %v1835
        %v1837 = vmul.f32 %v1785, 1.442695
        %v1838 = vpow.pop %v1837
        %v1839 = vmul.f32 %v1786, 1.442695
        %v1840 = vpow.pop %v1839
        %v1841 = vmul.f32 %v1787, 1.442695
        %v1842 = vpow.pop %v1841
        %v1843 = vmul.f32 %v1788, 1.442695
        %v1844 = vpow.pop %v1843
        %v1845 = vmul.f32 %v1789, 1.442695
        %v1846 = vpow.pop %v1845
        %v1847 = vmul.f32 %v1790, 1.442695
        %v1848 = vpow.pop %v1847
        %v1849 = vmul.f32 %v1791, 1.442695
        %v1850 = vpow.pop %v1849
        %v1851 = vmul.f32 %v1792, 1.442695
        %v1852 = vpow.pop %v1851
        %v1853 = vmul.f32 %v1793, 1.442695
        %v1854 = vpow.pop %v1853
        %v1855 = vmul.f32 %v1794, 1.442695
        %v1856 = vpow.pop %v1855
        %v1857 = vmul.f32 %v1795, 1.442695
        %v1858 = vpow.pop %v1857
        %v1859 = vmul.f32 %v1796, 1.442695
        %v1860 = vpow.pop %v1859
        %v1861 = vsel %vm1653, %v1798, 0.0
        %v1862 = vsel %vm1654, %v1800, 0.0
        %v1863 = vsel %vm1655, %v1802, 0.0
        %v1864 = vsel %vm1656, %v1804, 0.0
        %v1865 = vsel %vm1657, %v1806, 0.0
        %v1866 = vsel %vm1658, %v1808, 0.0
        %v1867 = vsel %vm1659, %v1810, 0.0
        %v1868 = vsel %vm1660, %v1812, 0.0
        %v1869 = vsel %vm1661, %v1814, 0.0
        %v1870 = vsel %vm1662, %v1816, 0.0
        %v1871 = vsel %vm1663, %v1818, 0.0
        %v1872 = vsel %vm1664, %v1820, 0.0
        %v1873 = vsel %vm1665, %v1822, 0.0
        %v1874 = vsel %vm1666, %v1824, 0.0
        %v1875 = vsel %vm1667, %v1826, 0.0
        %v1876 = vsel %vm1668, %v1828, 0.0
        %v1877 = vsel %vm1669, %v1830, 0.0
        %v1878 = vsel %vm1670, %v1832, 0.0
        %v1879 = vsel %vm1671, %v1834, 0.0
        %v1880 = vsel %vm1672, %v1836, 0.0
        %v1881 = vsel %vm1673, %v1838, 0.0
        %v1882 = vsel %vm1674, %v1840, 0.0
        %v1883 = vsel %vm1675, %v1842, 0.0
        %v1884 = vsel %vm1676, %v1844, 0.0
        %v1885 = vsel %vm1677, %v1846, 0.0
        %v1886 = vsel %vm1678, %v1848, 0.0
        %v1887 = vsel %vm1679, %v1850, 0.0
        %v1888 = vsel %vm1680, %v1852, 0.0
        %v1889 = vsel %vm1681, %v1854, 0.0
        %v1890 = vsel %vm1682, %v1856, 0.0
        %v1891 = vsel %vm1683, %v1858, 0.0
        %v1892 = vsel %vm1684, %v1860, 0.0
        %v1893 = vadd.f32 %v1861, %v1862
        %1894 = vadd.xlane.f32.xlu0 %v1893
        %v1895 = vpop.xlane.xlu0 %1894
        %v1896 = vadd.f32 %v1863, %v1864
        %1897 = vadd.xlane.f32.xlu0 %v1896
        %v1898 = vpop.xlane.xlu0 %1897
        %v1899 = vadd.f32 %v1865, %v1866
        %1900 = vadd.xlane.f32.xlu0 %v1899
        %v1901 = vpop.xlane.xlu0 %1900
        %v1902 = vadd.f32 %v1867, %v1868
        %1903 = vadd.xlane.f32.xlu0 %v1902
        %v1904 = vpop.xlane.xlu0 %1903
        %v1905 = vadd.f32 %v1869, %v1870
        %1906 = vadd.xlane.f32.xlu0 %v1905
        %v1907 = vpop.xlane.xlu0 %1906
        %v1908 = vadd.f32 %v1871, %v1872
        %1909 = vadd.xlane.f32.xlu0 %v1908
        %v1910 = vpop.xlane.xlu0 %1909
        %v1911 = vadd.f32 %v1873, %v1874
        %1912 = vadd.xlane.f32.xlu0 %v1911
        %v1913 = vpop.xlane.xlu0 %1912
        %v1914 = vadd.f32 %v1875, %v1876
        %1915 = vadd.xlane.f32.xlu0 %v1914
        %v1916 = vpop.xlane.xlu0 %1915
        %v1917 = vadd.f32 %v1877, %v1878
        %1918 = vadd.xlane.f32.xlu0 %v1917
        %v1919 = vpop.xlane.xlu0 %1918
        %v1920 = vadd.f32 %v1879, %v1880
        %1921 = vadd.xlane.f32.xlu0 %v1920
        %v1922 = vpop.xlane.xlu0 %1921
        %v1923 = vadd.f32 %v1881, %v1882
        %1924 = vadd.xlane.f32.xlu0 %v1923
        %v1925 = vpop.xlane.xlu0 %1924
        %v1926 = vadd.f32 %v1883, %v1884
        %1927 = vadd.xlane.f32.xlu0 %v1926
        %v1928 = vpop.xlane.xlu0 %1927
        %v1929 = vadd.f32 %v1885, %v1886
        %1930 = vadd.xlane.f32.xlu0 %v1929
        %v1931 = vpop.xlane.xlu0 %1930
        %v1932 = vadd.f32 %v1887, %v1888
        %1933 = vadd.xlane.f32.xlu0 %v1932
        %v1934 = vpop.xlane.xlu0 %1933
        %v1935 = vadd.f32 %v1889, %v1890
        %1936 = vadd.xlane.f32.xlu0 %v1935
        %v1937 = vpop.xlane.xlu0 %1936
        %v1938 = vadd.f32 %v1891, %v1892
        %1939 = vadd.xlane.f32.xlu0 %v1938
        %v1940 = vpop.xlane.xlu0 %1939
        %vm1941 = vcmp.gt.f32.partialorder %v1895, 0.0
        %vm1942 = vcmp.gt.f32.partialorder %v1898, 0.0
        %vm1943 = vcmp.gt.f32.partialorder %v1901, 0.0
        %vm1944 = vcmp.gt.f32.partialorder %v1904, 0.0
        %vm1945 = vcmp.gt.f32.partialorder %v1907, 0.0
        %vm1946 = vcmp.gt.f32.partialorder %v1910, 0.0
        %vm1947 = vcmp.gt.f32.partialorder %v1913, 0.0
        %vm1948 = vcmp.gt.f32.partialorder %v1916, 0.0
        %vm1949 = vcmp.gt.f32.partialorder %v1919, 0.0
        %vm1950 = vcmp.gt.f32.partialorder %v1922, 0.0
        %vm1951 = vcmp.gt.f32.partialorder %v1925, 0.0
        %vm1952 = vcmp.gt.f32.partialorder %v1928, 0.0
        %vm1953 = vcmp.gt.f32.partialorder %v1931, 0.0
        %vm1954 = vcmp.gt.f32.partialorder %v1934, 0.0
        %vm1955 = vcmp.gt.f32.partialorder %v1937, 0.0
        %vm1956 = vcmp.gt.f32.partialorder %v1940, 0.0
        %v1957 = vmax.f32 %v1895, 1e-30
        %v1958 = vmax.f32 %v1898, 1e-30
        %v1959 = vmax.f32 %v1901, 1e-30
        %v1960 = vmax.f32 %v1904, 1e-30
        %v1961 = vmax.f32 %v1907, 1e-30
        %v1962 = vmax.f32 %v1910, 1e-30
        %v1963 = vmax.f32 %v1913, 1e-30
        %v1964 = vmax.f32 %v1916, 1e-30
        %v1965 = vmax.f32 %v1919, 1e-30
        %v1966 = vmax.f32 %v1922, 1e-30
        %v1967 = vmax.f32 %v1925, 1e-30
        %v1968 = vmax.f32 %v1928, 1e-30
        %v1969 = vmax.f32 %v1931, 1e-30
        %v1970 = vmax.f32 %v1934, 1e-30
        %v1971 = vmax.f32 %v1937, 1e-30
        %v1972 = vmax.f32 %v1940, 1e-30
        %v1973 = vrcp.pop %v1957
        %v1974 = vrcp.pop %v1958
        %v1975 = vrcp.pop %v1959
        %v1976 = vrcp.pop %v1960
        %v1977 = vrcp.pop %v1961
        %v1978 = vrcp.pop %v1962
        %v1979 = vrcp.pop %v1963
        %v1980 = vrcp.pop %v1964
        %v1981 = vrcp.pop %v1965
        %v1982 = vrcp.pop %v1966
        %v1983 = vrcp.pop %v1967
        %v1984 = vrcp.pop %v1968
        %v1985 = vrcp.pop %v1969
        %v1986 = vrcp.pop %v1970
        %v1987 = vrcp.pop %v1971
        %v1988 = vrcp.pop %v1972
        %v1989 = vsel %vm1941, %v1973, 0.0
        %v1990 = vsel %vm1942, %v1974, 0.0
        %v1991 = vsel %vm1943, %v1975, 0.0
        %v1992 = vsel %vm1944, %v1976, 0.0
        %v1993 = vsel %vm1945, %v1977, 0.0
        %v1994 = vsel %vm1946, %v1978, 0.0
        %v1995 = vsel %vm1947, %v1979, 0.0
        %v1996 = vsel %vm1948, %v1980, 0.0
        %v1997 = vsel %vm1949, %v1981, 0.0
        %v1998 = vsel %vm1950, %v1982, 0.0
        %v1999 = vsel %vm1951, %v1983, 0.0
        %v2000 = vsel %vm1952, %v1984, 0.0
        %v2001 = vsel %vm1953, %v1985, 0.0
        %v2002 = vsel %vm1954, %v1986, 0.0
        %v2003 = vsel %vm1955, %v1987, 0.0
        %v2004 = vsel %vm1956, %v1988, 0.0
        %v2005 = vpack.c.bf16 %v1863, %v1861
        %v2006 = vpack.c.bf16 %v1864, %v1862
        %v2007 = vpack.c.bf16 %v1867, %v1865
        %v2008 = vpack.c.bf16 %v1868, %v1866
        %v2009 = vpack.c.bf16 %v1871, %v1869
        %v2010 = vpack.c.bf16 %v1872, %v1870
        %v2011 = vpack.c.bf16 %v1875, %v1873
        %v2012 = vpack.c.bf16 %v1876, %v1874
        %v2013 = vpack.c.bf16 %v1879, %v1877
        %v2014 = vpack.c.bf16 %v1880, %v1878
        %v2015 = vpack.c.bf16 %v1883, %v1881
        %v2016 = vpack.c.bf16 %v1884, %v1882
        %v2017 = vpack.c.bf16 %v1887, %v1885
        %v2018 = vpack.c.bf16 %v1888, %v1886
        %v2019 = vpack.c.bf16 %v1891, %v1889
        %v2020 = vpack.c.bf16 %v1892, %v1890
        %v2053 = vunpack.c.l.b16 %v1268
        %v2054 = vunpack.c.l.b16 %v1269
        %v2055 = vunpack.c.l.b16 %v1270
        %v2056 = vunpack.c.l.b16 %v1271
        %v2057 = vunpack.c.l.b16 %v1272
        %v2058 = vunpack.c.l.b16 %v1273
        %v2059 = vunpack.c.l.b16 %v1274
        %v2060 = vunpack.c.l.b16 %v1275
        %v2061 = vunpack.c.l.b16 %v1276
        %v2062 = vunpack.c.l.b16 %v1277
        %v2063 = vunpack.c.l.b16 %v1278
        %v2064 = vunpack.c.l.b16 %v1279
        %v2065 = vunpack.c.l.b16 %v1280
        %v2066 = vunpack.c.l.b16 %v1281
        %v2067 = vunpack.c.l.b16 %v1282
        %v2068 = vunpack.c.l.b16 %v1283
        %v2069 = vunpack.c.l.b16 %v1284
        %v2070 = vunpack.c.l.b16 %v1285
        %v2071 = vunpack.c.l.b16 %v1286
        %v2072 = vunpack.c.l.b16 %v1287
        %v2073 = vunpack.c.l.b16 %v1288
        %v2074 = vunpack.c.l.b16 %v1289
        %v2075 = vunpack.c.l.b16 %v1290
        %v2076 = vunpack.c.l.b16 %v1291
        %v2077 = vunpack.c.l.b16 %v1292
        %v2078 = vunpack.c.l.b16 %v1293
        %v2079 = vunpack.c.l.b16 %v1294
        %v2080 = vunpack.c.l.b16 %v1295
        %v2081 = vunpack.c.l.b16 %v1296
        %v2082 = vunpack.c.l.b16 %v1297
        %v2083 = vunpack.c.l.b16 %v1298
        %v2084 = vunpack.c.l.b16 %v1299
        %v2085 = vpack.c.b16 %v2054, %v2053
        %v2086 = vpack.c.b16 %v2056, %v2055
        %v2087 = vpack.c.b16 %v2058, %v2057
        %v2088 = vpack.c.b16 %v2060, %v2059
        %v2089 = vpack.c.b16 %v2062, %v2061
        %v2090 = vpack.c.b16 %v2064, %v2063
        %v2091 = vpack.c.b16 %v2066, %v2065
        %v2092 = vpack.c.b16 %v2068, %v2067
        %v2093 = vpack.c.b16 %v2070, %v2069
        %v2094 = vpack.c.b16 %v2072, %v2071
        %v2095 = vpack.c.b16 %v2074, %v2073
        %v2096 = vpack.c.b16 %v2076, %v2075
        %v2097 = vpack.c.b16 %v2078, %v2077
        %v2098 = vpack.c.b16 %v2080, %v2079
        %v2099 = vpack.c.b16 %v2082, %v2081
        %v2100 = vpack.c.b16 %v2084, %v2083
        %2117 = vmatpush.bf16.msra.mxu0 %v2092
        %2118 = vmatpush.bf16.msra.mxu0 %v2091
        %2119 = vmatpush.bf16.msra.mxu0 %v2090
        %2120 = vmatpush.bf16.msra.mxu0 %v2089
        %2121 = vmatpush.bf16.msra.mxu0 %v2088
        %2122 = vmatpush.bf16.msra.mxu0 %v2087
        %2123 = vmatpush.bf16.msra.mxu0 %v2086
        %2124 = vmatpush.bf16.msra.mxu0 %v2085
        %2125 = vmatmul.bf16.gmra.mxu0 %v2005
        %v2126 = vpop.f32.mrf.mxu0
        %v2127 = vadd.f32 0.0, %v2126
        %v2128 = vpop.f32.mrf.mxu0
        %v2129 = vadd.f32 0.0, %v2128
        %2130 = vmatmul.bf16.gmra.mxu0 %v2007
        %v2131 = vpop.f32.mrf.mxu0
        %v2132 = vadd.f32 0.0, %v2131
        %v2133 = vpop.f32.mrf.mxu0
        %v2134 = vadd.f32 0.0, %v2133
        %2135 = vmatmul.bf16.gmra.mxu0 %v2009
        %v2136 = vpop.f32.mrf.mxu0
        %v2137 = vadd.f32 0.0, %v2136
        %v2138 = vpop.f32.mrf.mxu0
        %v2139 = vadd.f32 0.0, %v2138
        %2140 = vmatmul.bf16.gmra.mxu0 %v2011
        %v2141 = vpop.f32.mrf.mxu0
        %v2142 = vadd.f32 0.0, %v2141
        %v2143 = vpop.f32.mrf.mxu0
        %v2144 = vadd.f32 0.0, %v2143
        %2145 = vmatmul.bf16.gmra.mxu0 %v2013
        %v2146 = vpop.f32.mrf.mxu0
        %v2147 = vadd.f32 0.0, %v2146
        %v2148 = vpop.f32.mrf.mxu0
        %v2149 = vadd.f32 0.0, %v2148
        %2150 = vmatmul.bf16.gmra.mxu0 %v2015
        %v2151 = vpop.f32.mrf.mxu0
        %v2152 = vadd.f32 0.0, %v2151
        %v2153 = vpop.f32.mrf.mxu0
        %v2154 = vadd.f32 0.0, %v2153
        %2155 = vmatmul.bf16.gmra.mxu0 %v2017
        %v2156 = vpop.f32.mrf.mxu0
        %v2157 = vadd.f32 0.0, %v2156
        %v2158 = vpop.f32.mrf.mxu0
        %v2159 = vadd.f32 0.0, %v2158
        %2160 = vmatmul.bf16.gmra.mxu0 %v2019
        %v2161 = vpop.f32.mrf.mxu0
        %v2162 = vadd.f32 0.0, %v2161
        %v2163 = vpop.f32.mrf.mxu0
        %v2164 = vadd.f32 0.0, %v2163
        %2165 = vdwg.mxu0
        %2166 = vmatpush.bf16.msra.mxu0 %v2100
        %2167 = vmatpush.bf16.msra.mxu0 %v2099
        %2168 = vmatpush.bf16.msra.mxu0 %v2098
        %2169 = vmatpush.bf16.msra.mxu0 %v2097
        %2170 = vmatpush.bf16.msra.mxu0 %v2096
        %2171 = vmatpush.bf16.msra.mxu0 %v2095
        %2172 = vmatpush.bf16.msra.mxu0 %v2094
        %2173 = vmatpush.bf16.msra.mxu0 %v2093
        %2174 = vmatmul.bf16.gmra.mxu0 %v2006
        %v2175 = vpop.f32.mrf.mxu0
        %v2176 = vadd.f32 %v2127, %v2175
        %v2177 = vpop.f32.mrf.mxu0
        %v2178 = vadd.f32 %v2129, %v2177
        %2179 = vmatmul.bf16.gmra.mxu0 %v2008
        %v2180 = vpop.f32.mrf.mxu0
        %v2181 = vadd.f32 %v2132, %v2180
        %v2182 = vpop.f32.mrf.mxu0
        %v2183 = vadd.f32 %v2134, %v2182
        %2184 = vmatmul.bf16.gmra.mxu0 %v2010
        %v2185 = vpop.f32.mrf.mxu0
        %v2186 = vadd.f32 %v2137, %v2185
        %v2187 = vpop.f32.mrf.mxu0
        %v2188 = vadd.f32 %v2139, %v2187
        %2189 = vmatmul.bf16.gmra.mxu0 %v2012
        %v2190 = vpop.f32.mrf.mxu0
        %v2191 = vadd.f32 %v2142, %v2190
        %v2192 = vpop.f32.mrf.mxu0
        %v2193 = vadd.f32 %v2144, %v2192
        %2194 = vmatmul.bf16.gmra.mxu0 %v2014
        %v2195 = vpop.f32.mrf.mxu0
        %v2196 = vadd.f32 %v2147, %v2195
        %v2197 = vpop.f32.mrf.mxu0
        %v2198 = vadd.f32 %v2149, %v2197
        %2199 = vmatmul.bf16.gmra.mxu0 %v2016
        %v2200 = vpop.f32.mrf.mxu0
        %v2201 = vadd.f32 %v2152, %v2200
        %v2202 = vpop.f32.mrf.mxu0
        %v2203 = vadd.f32 %v2154, %v2202
        %2204 = vmatmul.bf16.gmra.mxu0 %v2018
        %v2205 = vpop.f32.mrf.mxu0
        %v2206 = vadd.f32 %v2157, %v2205
        %v2207 = vpop.f32.mrf.mxu0
        %v2208 = vadd.f32 %v2159, %v2207
        %2209 = vmatmul.bf16.gmra.mxu0 %v2020
        %v2210 = vpop.f32.mrf.mxu0
        %v2211 = vadd.f32 %v2162, %v2210
        %v2212 = vpop.f32.mrf.mxu0
        %v2213 = vadd.f32 %v2164, %v2212
        %2214 = vdwg.mxu0
        %v2215 = vmul.f32 %v2176, %v1989
        %v2216 = vmul.f32 %v2178, %v1990
        %v2217 = vmul.f32 %v2181, %v1991
        %v2218 = vmul.f32 %v2183, %v1992
        %v2219 = vmul.f32 %v2186, %v1993
        %v2220 = vmul.f32 %v2188, %v1994
        %v2221 = vmul.f32 %v2191, %v1995
        %v2222 = vmul.f32 %v2193, %v1996
        %v2223 = vmul.f32 %v2196, %v1997
        %v2224 = vmul.f32 %v2198, %v1998
        %v2225 = vmul.f32 %v2201, %v1999
        %v2226 = vmul.f32 %v2203, %v2000
        %v2227 = vmul.f32 %v2206, %v2001
        %v2228 = vmul.f32 %v2208, %v2002
        %v2229 = vmul.f32 %v2211, %v2003
        %v2230 = vmul.f32 %v2213, %v2004
        %2231 = vadd.xlane.f32.xlu0 %v2215
        %v2232 = vpop.xlane.xlu0 %2231
        %2233 = vadd.xlane.f32.xlu0 %v2216
        %v2234 = vpop.xlane.xlu0 %2233
        %2235 = vadd.xlane.f32.xlu0 %v2217
        %v2236 = vpop.xlane.xlu0 %2235
        %2237 = vadd.xlane.f32.xlu0 %v2218
        %v2238 = vpop.xlane.xlu0 %2237
        %2239 = vadd.xlane.f32.xlu0 %v2219
        %v2240 = vpop.xlane.xlu0 %2239
        %2241 = vadd.xlane.f32.xlu0 %v2220
        %v2242 = vpop.xlane.xlu0 %2241
        %2243 = vadd.xlane.f32.xlu0 %v2221
        %v2244 = vpop.xlane.xlu0 %2243
        %2245 = vadd.xlane.f32.xlu0 %v2222
        %v2246 = vpop.xlane.xlu0 %2245
        %2247 = vadd.xlane.f32.xlu0 %v2223
        %v2248 = vpop.xlane.xlu0 %2247
        %2249 = vadd.xlane.f32.xlu0 %v2224
        %v2250 = vpop.xlane.xlu0 %2249
        %2251 = vadd.xlane.f32.xlu0 %v2225
        %v2252 = vpop.xlane.xlu0 %2251
        %2253 = vadd.xlane.f32.xlu0 %v2226
        %v2254 = vpop.xlane.xlu0 %2253
        %2255 = vadd.xlane.f32.xlu0 %v2227
        %v2256 = vpop.xlane.xlu0 %2255
        %2257 = vadd.xlane.f32.xlu0 %v2228
        %v2258 = vpop.xlane.xlu0 %2257
        %2259 = vadd.xlane.f32.xlu0 %v2229
        %v2260 = vpop.xlane.xlu0 %2259
        %2261 = vadd.xlane.f32.xlu0 %v2230
        %v2262 = vpop.xlane.xlu0 %2261
        %v2263 = vadd.f32 %v2232, %v2234
        %v2264 = vadd.f32 %v2263, %v2236
        %v2265 = vadd.f32 %v2264, %v2238
        %v2266 = vadd.f32 %v2265, %v2240
        %v2267 = vadd.f32 %v2266, %v2242
        %v2268 = vadd.f32 %v2267, %v2244
        %v2269 = vadd.f32 %v2268, %v2246
        %v2270 = vadd.f32 %v2269, %v2248
        %v2271 = vadd.f32 %v2270, %v2250
        %v2272 = vadd.f32 %v2271, %v2252
        %v2273 = vadd.f32 %v2272, %v2254
        %v2274 = vadd.f32 %v2273, %v2256
        %v2275 = vadd.f32 %v2274, %v2258
        %v2276 = vadd.f32 %v2275, %v2260
        %v2277 = vadd.f32 %v2276, %v2262
        %v2278 = vrot.slane %v2277, 4
        %v2279 = vadd.f32 %v2277, %v2278
        %v2280 = vrot.slane %v2279, 2
        %v2281 = vadd.f32 %v2279, %v2280
        %v2282 = vrot.slane %v2281, 1
        %v2283 = vadd.f32 %v2281, %v2282
        %v2284 = vld [vmem:[#allocation4] sm:$0x1]
        %v2285 = vadd.f32 %v2284, %v2283
        %vm2286 = vcmask 0
        %2287 = vst.msk [vmem:[#allocation4] sm:$0x1] %vm2286, %v2285
        %p2288 = scmp.eq.s32.totalorder %s20, 1
        %p2289 = scmp.eq.s32.totalorder %s21, 3
        %p2290 = pnand %p2288, %p2289
        %p2291 = pneg %p2290
        // Predicated region
        $region41: #{tpu_custom_call.1} parent=35 // pred_check
          _
        $region42: #{tpu_custom_call.1} parent=35 // pred_check_branch
          %2293 = sbr.rel (%p2290) target = $region44
        $region43: #{tpu_custom_call.1} parent=35 // pred_region
          %v2294 = vld [vmem:[#allocation4] sm:$0x1]
          %2295 = vst.msk [vmem:[#allocation5] sm:$0x1] %vm2286, %v2294
        $region44: #{tpu_custom_call.1} parent=35 // pred_fallthru
          _
        // Predicated region
        $region45: #{tpu_custom_call.1} parent=35 // pred_check
          %p2296 = pneg %p130
        $region46: #{tpu_custom_call.1} parent=35 // pred_check_branch
          %2298 = sbr.rel (%p2296) target = $region48
        $region47: #{tpu_custom_call.1} parent=35 // pred_region
          %2300 = vsyncadd [#allocation6], 0
          %s2302 = sshll.u32 [#allocation5], 4
          %s2303 = int_to_ptr.vmem [resolvable:$true] %s2302
          %s2304 = sshll.u32 %s4, 4
          %s2305 = int_to_ptr.hbm [resolvable:$true] %s2304
          %2307 = dma.vmem_to_hbm [thread:$0]  %s2303, 16, %s2305, [#allocation6]
        $region48: #{tpu_custom_call.1} parent=35 // pred_fallthru
          _
        // Predicated region
        $region49: #{tpu_custom_call.1} parent=35 // pred_check
          %p2308 = pneg %p130
        $region50: #{tpu_custom_call.1} parent=35 // pred_check_branch
          %2310 = sbr.rel (%p2308) target = $region52
        $region51: #{tpu_custom_call.1} parent=35 // pred_region
          %2312 = dma.done [#allocation6], 16
        $region52: #{tpu_custom_call.1} parent=35 // pred_fallthru
          _
      $region36: #{tpu_custom_call.1} parent=5 // pred_fallthru
        _
      %p2313 = scmp.le.s32.totalorder 2, %s11
      // Predicated region
      $region53: #{tpu_custom_call.1} parent=5 // pred_check
        %p2314 = pneg %p2313
      $region54: #{tpu_custom_call.1} parent=5 // pred_check_branch
        %2316 = sbr.rel (%p2314) target = $region56
      $region55: #{tpu_custom_call.1} parent=5 // pred_region
        %s2317 = ssub.s32 %s11, 2
      $region56: #{tpu_custom_call.1} parent=5 // pred_fallthru
        _
    $region6: #{tpu_custom_call.1} parent=1 // loop_footer
      %s15 = sadd.s32 1, %s11
    $region7: #{tpu_custom_call.1} parent=1 // loop_footer_branch
      %10 = sbr.rel target = $region3
    $region8: #{tpu_custom_call.1} parent=1 // loop_exit
      _
    %2318 = vsyncpa [#allocation6], 1
    %s2319 = scalar_lea.sflag [#allocation6], 1
    %2320 = vsyncpa %s2319, 1

</llo_original>
